<compile_context>
chip_gen: v7x
topology: tpu7x:2x2x1
jax: 0.10.0
libtpu: 0.0.40
codegen_flags: <defaults>
</compile_context>

<pallas_src>
import functools

import jax
import jax.numpy as jnp
from jax import lax
from jax.experimental import pallas as pl
from jax.experimental.pallas import tpu as pltpu


def _head_kernel(x_ref, wqkv_ref, o_ref, *, hs, hs_p):
    """Fused causal attention for a block of B_blk batch elements.

    x_ref    : (B_blk, T, C)        f32 activations
    wqkv_ref : (C, 2*hs_p + hs)     bf16 [Wq*scale pad | Wk pad | Wv]
    o_ref    : (B_blk, T, hs)       f32 attention output
    """
    Bb, T, C = x_ref.shape

    # QKV projection: one wide bf16 MXU matmul over the flattened batch*time
    # slab (M = Bb*T fills the 256-wide MXU on v6e/v7x), f32 accumulation.
    x2 = x_ref[...].reshape(Bb * T, C).astype(jnp.bfloat16)
    qkv = jnp.dot(x2, wqkv_ref[...], preferred_element_type=jnp.float32)

    # hs_p is a multiple of 128 so the q/k slices are lane-aligned; the scale
    # C**-0.5 was folded into Wq at prep time.  Padded q/k columns are zero and
    # contribute exactly 0 to the scores.
    q = qkv[:, 0 * hs_p:1 * hs_p].astype(jnp.bfloat16).reshape(Bb, T, hs_p)
    k = qkv[:, 1 * hs_p:2 * hs_p].astype(jnp.bfloat16).reshape(Bb, T, hs_p)
    v = qkv[:, 2 * hs_p:2 * hs_p + hs].astype(jnp.bfloat16).reshape(Bb, T, hs)

    # scores = (q*scale) @ k^T, contracting the feature dim (no k.T copy).
    s = jnp.einsum("bqd,bkd->bqk", q, k,
                   preferred_element_type=jnp.float32)          # (Bb, T, T) f32

    # causal mask (tril): keep col <= row else -inf.  Diagonal always kept, so
    # every softmax row has a finite entry (no NaNs).
    row = lax.broadcasted_iota(jnp.int32, (Bb, T, T), 1)
    col = lax.broadcasted_iota(jnp.int32, (Bb, T, T), 2)
    s = jnp.where(col <= row, s, -jnp.inf)

    # Online-free softmax in f32 (v5e VPU/EUP have no bf16).
    m = jnp.max(s, axis=-1, keepdims=True)
    p = jnp.exp(s - m)
    denom = jnp.sum(p, axis=-1, keepdims=True)                  # (Bb, T, 1) f32

    # TODO(synk): nn.Dropout(0.2) on the attention weights is eval-mode identity.

    # PV matmul on unnormalized bf16 probabilities, f32 accumulation, then
    # normalize the (T, hs) output with an exact reciprocal of the (T, 1) denom.
    o = jnp.einsum("bqk,bkd->bqd", p.astype(jnp.bfloat16), v,
                   preferred_element_type=jnp.float32)
    o_ref[...] = (o * pl.reciprocal(denom)).astype(o_ref.dtype)


def prepare_head_weights(wq, wk, wv):
    """One-time (off the hot path) fused-weight build.

    Returns a bf16 (C, 2*hs_p + hs) operand: [Wq * C**-0.5 | Wk] padded to 128
    lanes each, plus Wv unpadded.  Folding the reference's C**-0.5 scale into
    Wq is exact and removes a per-call (T,T) multiply from the kernel.
    """
    C, hs = wq.shape
    scale = float(C) ** (-0.5)          # reference scales by n_embd (C)
    hs_p = ((hs + 127) // 128) * 128
    pad = lambda w: jnp.pad(w, ((0, 0), (0, hs_p - hs)))
    wqkv = jnp.concatenate([pad(wq * scale), pad(wk), wv], axis=1)
    return wqkv.astype(jnp.bfloat16)


@functools.partial(jax.jit, static_argnames=("head_size",))
def head_forward(x, wqkv, head_size):
    """Pallas forward for Head: x (B, T, C) f32, wqkv from prepare_head_weights."""
    B, T, C = x.shape
    hs_p = ((head_size + 127) // 128) * 128
    assert wqkv.shape == (C, 2 * hs_p + head_size)

    # Pick the batch block so the projection M-dim (B_blk*T) reaches ~256 rows
    # (fills v6e/v7x MXUs) while keeping B divisible by the block.
    target = max(1, 256 // T)
    b_blk = 1
    for cand in range(min(B, target), 0, -1):
        if B % cand == 0:
            b_blk = cand
            break

    return pl.pallas_call(
        functools.partial(_head_kernel, hs=head_size, hs_p=hs_p),
        out_shape=jax.ShapeDtypeStruct((B, T, head_size), jnp.float32),
        grid=(B // b_blk,),
        in_specs=[
            pl.BlockSpec((b_blk, T, C), lambda b: (b, 0, 0)),        # activations
            pl.BlockSpec((C, 2 * hs_p + head_size), lambda b: (0, 0)),  # weights, grid-invariant
        ],
        out_specs=pl.BlockSpec((b_blk, T, head_size), lambda b: (b, 0, 0)),
        compiler_params=pltpu.CompilerParams(
            dimension_semantics=("parallel",)),      # batch blocks across TCs on v7x
    )(x, wqkv)


def _reference_head(x, wq, wk, wv):
    """Pure-JAX f32 reference matching the PyTorch Head.forward (eval mode)."""
    B, T, C = x.shape
    hp = lax.Precision.HIGHEST
    q = jnp.einsum("btc,ch->bth", x, wq, precision=hp)
    k = jnp.einsum("btc,ch->bth", x, wk, precision=hp)
    v = jnp.einsum("btc,ch->bth", x, wv, precision=hp)
    s = jnp.einsum("bqh,bkh->bqk", q, k, precision=hp) * (C ** -0.5)
    s = jnp.where(jnp.tril(jnp.ones((T, T), bool)), s, -jnp.inf)
    p = jax.nn.softmax(s, axis=-1)
    return jnp.einsum("bqk,bkh->bqh", p, v, precision=hp)


if __name__ == "__main__":
    n_embd = 384          # fixed by the reference module
    head_size = 64        # canonical v2.py choice: n_embd // n_head with n_head=6
    B, T = 8, 128         # T <= block_size (256); B chosen so each v7x TC gets 2 steps

    key = jax.random.PRNGKey(0)
    kx, kq, kk, kv = jax.random.split(key, 4)
    x = jax.random.normal(kx, (B, T, n_embd), jnp.float32)
    bound = 1.0 / (n_embd ** 0.5)    # torch nn.Linear default init range
    wq = jax.random.uniform(kq, (n_embd, head_size), jnp.float32, -bound, bound)
    wk = jax.random.uniform(kk, (n_embd, head_size), jnp.float32, -bound, bound)
    wv = jax.random.uniform(kv, (n_embd, head_size), jnp.float32, -bound, bound)

    # Fused weight built once, off the per-call hot path.
    wqkv = jax.block_until_ready(prepare_head_weights(wq, wk, wv))

    out = jax.block_until_ready(head_forward(x, wqkv, head_size))
    assert out.shape == (B, T, head_size)
    assert bool(jnp.all(jnp.isfinite(out)))

    ref = _reference_head(x, wq, wk, wv)
    err = float(jnp.max(jnp.abs(out - ref)))
    assert bool(jnp.allclose(out, ref, rtol=2e-2, atol=2e-2)), f"max abs err {err}"
    print("KERNEL_OK")
</pallas_src>

<mosaic_0001>
module attributes {stable_mosaic.version = 11 : i64} {
  func.func @_head_kernel(%arg0: i32, %arg1: memref<2x128x384xf32, #tpu.memory_space<vmem>>, %arg2: memref<384x320xbf16, #tpu.memory_space<vmem>>, %arg3: memref<2x128x64xf32, #tpu.memory_space<vmem>>) attributes {dimension_semantics = [#tpu.dimension_semantics<parallel>], iteration_bounds = array<i64: 4>, scalar_prefetch = 0 : i64, scratch_operands = 0 : i64, tpu.core_type = #tpu.core_type<tc>, window_params = [{transform_indices = @transform_0, window_bounds = array<i64: 2, 128, 384>}, {pipeline_mode = #tpu.pipeline_mode<synchronous>, transform_indices = @transform_1, window_bounds = array<i64: 384, 320>}, {transform_indices = @transform_2, window_bounds = array<i64: 2, 128, 64>}]} {
    %c0 = arith.constant 0 : index
    %c0_0 = arith.constant 0 : index
    %c0_1 = arith.constant 0 : index
    %0 = vector.load %arg1[%c0, %c0_0, %c0_1] : memref<2x128x384xf32, #tpu.memory_space<vmem>>, vector<2x128x384xf32>
    %1 = vector.shape_cast %0 : vector<2x128x384xf32> to vector<256x384xf32>
    %2 = arith.truncf %1 : vector<256x384xf32> to vector<256x384xbf16>
    %c0_2 = arith.constant 0 : index
    %c0_3 = arith.constant 0 : index
    %3 = vector.load %arg2[%c0_2, %c0_3] : memref<384x320xbf16, #tpu.memory_space<vmem>>, vector<384x320xbf16>
    %cst = arith.constant dense<0.000000e+00> : vector<256x320xf32>
    %4 = tpu.matmul %2, %3, %cst {dimension_numbers = #tpu.dot_dimension_numbers<[1], [0], [0], [1], [0, 0, 1, 1], [], []>} : vector<256x384xbf16>, vector<384x320xbf16>, vector<256x320xf32> -> vector<256x320xf32>
    %5 = vector.extract_strided_slice %4 {offsets = [0, 0], sizes = [256, 128], strides = [1, 1]} : vector<256x320xf32> to vector<256x128xf32>
    %6 = arith.truncf %5 : vector<256x128xf32> to vector<256x128xbf16>
    %7 = vector.shape_cast %6 : vector<256x128xbf16> to vector<2x128x128xbf16>
    %8 = vector.extract_strided_slice %4 {offsets = [0, 128], sizes = [256, 128], strides = [1, 1]} : vector<256x320xf32> to vector<256x128xf32>
    %9 = arith.truncf %8 : vector<256x128xf32> to vector<256x128xbf16>
    %10 = vector.shape_cast %9 : vector<256x128xbf16> to vector<2x128x128xbf16>
    %11 = vector.extract_strided_slice %4 {offsets = [0, 256], sizes = [256, 64], strides = [1, 1]} : vector<256x320xf32> to vector<256x64xf32>
    %12 = arith.truncf %11 : vector<256x64xf32> to vector<256x64xbf16>
    %13 = vector.shape_cast %12 : vector<256x64xbf16> to vector<2x128x64xbf16>
    "tpu.trace_start"() <{level = 10 : i32, message = "bqd,bkd->bqk"}> : () -> ()
    %cst_4 = arith.constant dense<0.000000e+00> : vector<2x128x128xf32>
    %14 = tpu.matmul %7, %10, %cst_4 {dimension_numbers = #tpu.dot_dimension_numbers<[2], [2], [1], [1], [0, 0, 0, 1, 1, 1], [0], [0]>} : vector<2x128x128xbf16>, vector<2x128x128xbf16>, vector<2x128x128xf32> -> vector<2x128x128xf32>
    "tpu.trace_stop"() : () -> ()
    %15 = tpu.iota {dimensions = array<i32: 1>} : vector<2x128x128xi32>
    %16 = tpu.iota {dimensions = array<i32: 2>} : vector<2x128x128xi32>
    %17 = arith.cmpi sle, %16, %15 : vector<2x128x128xi32>
    %cst_5 = arith.constant 0xFF800000 : f32
    %18 = vector.broadcast %cst_5 : f32 to vector<2x128x128xf32>
    %19 = arith.select %17, %14, %18 : vector<2x128x128xi1>, vector<2x128x128xf32>
    %cst_6 = arith.constant dense<0xFF800000> : vector<2x128xf32>
    %20 = vector.multi_reduction <maximumf>, %19, %cst_6 [2] : vector<2x128x128xf32> to vector<2x128xf32>
    %21 = vector.shape_cast %20 : vector<2x128xf32> to vector<2x128x1xf32>
    %22 = vector.broadcast %21 : vector<2x128x1xf32> to vector<2x128x128xf32>
    %23 = arith.subf %19, %22 : vector<2x128x128xf32>
    %24 = math.exp %23 : vector<2x128x128xf32>
    %cst_7 = arith.constant dense<0.000000e+00> : vector<2x128xf32>
    %25 = vector.multi_reduction <add>, %24, %cst_7 [2] : vector<2x128x128xf32> to vector<2x128xf32>
    %26 = vector.shape_cast %25 : vector<2x128xf32> to vector<2x128x1xf32>
    %27 = arith.truncf %24 : vector<2x128x128xf32> to vector<2x128x128xbf16>
    "tpu.trace_start"() <{level = 10 : i32, message = "bqk,bkd->bqd"}> : () -> ()
    %cst_8 = arith.constant dense<0.000000e+00> : vector<2x128x64xf32>
    %28 = tpu.matmul %27, %13, %cst_8 {dimension_numbers = #tpu.dot_dimension_numbers<[2], [1], [1], [2], [0, 0, 0, 1, 1, 2], [0], [0]>} : vector<2x128x128xbf16>, vector<2x128x64xbf16>, vector<2x128x64xf32> -> vector<2x128x64xf32>
    "tpu.trace_stop"() : () -> ()
    %29 = tpu.reciprocal %26 : vector<2x128x1xf32> -> vector<2x128x1xf32>
    %30 = vector.broadcast %29 : vector<2x128x1xf32> to vector<2x128x64xf32>
    %31 = arith.mulf %28, %30 : vector<2x128x64xf32>
    %c0_9 = arith.constant 0 : index
    %c0_10 = arith.constant 0 : index
    %c0_11 = arith.constant 0 : index
    %32 = vector.load %arg3[%c0_9, %c0_10, %c0_11] : memref<2x128x64xf32, #tpu.memory_space<vmem>>, vector<2x128x64xf32>
    tpu.vector_store %arg3[%c0_9, %c0_10, %c0_11], %31 {strides = array<i32>} : memref<2x128x64xf32, #tpu.memory_space<vmem>>, vector<2x128x64xf32>,
    return
  }
  func.func @transform_0(%arg0: i32) -> (i32, i32, i32) {
    %c0_i32 = arith.constant 0 : i32
    %c0_i32_0 = arith.constant 0 : i32
    %c0_i32_1 = arith.constant 0 : i32
    return %arg0, %c0_i32, %c0_i32_0 : i32, i32, i32
  }
  func.func @transform_1(%arg0: i32) -> (i32, i32) {
    %c0_i32 = arith.constant 0 : i32
    %c0_i32_0 = arith.constant 0 : i32
    %c0_i32_1 = arith.constant 0 : i32
    return %c0_i32, %c0_i32_0 : i32, i32
  }
  func.func @transform_2(%arg0: i32) -> (i32, i32, i32) {
    %c0_i32 = arith.constant 0 : i32
    %c0_i32_0 = arith.constant 0 : i32
    %c0_i32_1 = arith.constant 0 : i32
    return %arg0, %c0_i32, %c0_i32_0 : i32, i32, i32
  }
}

</mosaic_0001>

<llo_original>
// kernel: head_forward.1
$region0: #{head_forward.1}
  #allocation0 [shape = 'u32[]', space=smem, size = 0x4, offset = 0x4, fixed_abs, tag = 'smem constant byte address 0x4 - core index']
  #allocation1 [shape = 'u32[144,128]{1,0:T(1,128)}', space=vmem, size = 0x12000, scoped, tag = 'internal scratch']
  %s0 = inlined_call_operand.hbm [shape: f32[8,128,384], index: 0, kind: input, shape index: {}]
  %s1 = inlined_call_operand.vmem [shape: bf16[384,320], index: 1, kind: input, shape index: {}]
  %s2 = inlined_call_operand.vmem [shape: f32[8,128,64], index: 2, kind: output, shape index: {}]
  %s3 = sld [smem:[#allocation0]]
  $region45: #{head_forward.1} parent=0
    _
  %s5 = ssub.s32 1, %s3
  %s6 = scalar_select 0, %s5, %s3
  $region1: #{head_forward.1} parent=0
    #allocation2 [shape = 'u8[786432]{0}', space=vmem, size = 0xc0000, scoped, tag = 'input window, operand 0']
    #allocation3 [shape = 's32[2]{0}', space=sflag, size = 0x8, scoped, tag = 'scoped memory for head_forward.1']
    %7 = vsyncpa [#allocation3], 0
    %s8 = scalar_lea.sflag [#allocation3], 1
    %9 = vsyncpa %s8, 0
    loop: start=0, step=1, limit=6
    $region2: #{head_forward.1} parent=1 // loop_pre_header
      _
    $region3: #{head_forward.1} parent=1 // loop_header
      %s11 = sphi 0, %s15
      %p12 = scmp.ge.s32.totalorder %s11, 6
      %s21 = sphi 0, %s23
      %s24 = sphi 0, %s21
      %s25 = sphi 0, %s24
      %s41 = sphi 0, %s25
      %s45 = sphi 0, %s45
      %s47 = sphi 0, %s45
      %s48 = sphi 0, %s47
      %s62 = sphi 0, %s48
      %s68 = sphi 0, %s70
      %s71 = sphi 0, %s68
      %s72 = sphi 0, %s71
      %s88 = sphi 0, %s72
    $region4: #{head_forward.1} parent=1 // loop_header_branch
      %14 = sbr.rel (%p12) target = $region8
    $region5: #{head_forward.1} parent=1 // loop_body
      %s16 = ssub.s32 %s11, 1
      %s17 = ssub.s32 %s11, 2
      %s18 = sadd.s32 %s11, 1
      %s19 = ssub.s32 %s11, %s18
      %p20 = scmp.eq.s32.totalorder %s19, 0
      %s22 = sadd.s32 %s21, 1
      %s23 = scalar_select %p20, %s21, %s22
      %p26 = pneg %p20
      %p27 = scmp.eq.s32.totalorder %s11, 3
      %p28 = por %p26, %p27
      %p29 = scmp.ne.s32.totalorder %s21, %s24
      %p30 = scmp.eq.s32.totalorder %s11, 0
      %p31 = por %p29, %p30
      %p32 = scmp.ne.s32.totalorder %s21, %s24
      %p33 = scmp.eq.s32.totalorder %s16, 3
      %p34 = por %p32, %p33
      %p35 = scmp.ne.s32.totalorder %s24, %s25
      %p36 = scmp.eq.s32.totalorder %s16, 0
      %p37 = por %p35, %p36
      %p38 = scmp.ne.s32.totalorder %s24, %s25
      %p39 = scmp.eq.s32.totalorder %s17, 3
      %p40 = por %p38, %p39
      %p42 = scmp.ne.s32.totalorder %s25, %s41
      %p43 = scmp.eq.s32.totalorder %s17, 0
      %p44 = por %p42, %p43
      %s46 = sadd.s32 %s45, 1
      %p49 = scmp.eq.s32.totalorder %s11, 3
      %p50 = scmp.ne.s32.totalorder %s45, %s47
      %p51 = scmp.eq.s32.totalorder %s11, 0
      %p52 = por %p50, %p51
      %p53 = scmp.ne.s32.totalorder %s45, %s47
      %p54 = scmp.eq.s32.totalorder %s16, 3
      %p55 = por %p53, %p54
      %p56 = scmp.ne.s32.totalorder %s47, %s48
      %p57 = scmp.eq.s32.totalorder %s16, 0
      %p58 = por %p56, %p57
      %p59 = scmp.ne.s32.totalorder %s47, %s48
      %p60 = scmp.eq.s32.totalorder %s17, 3
      %p61 = por %p59, %p60
      %p63 = scmp.ne.s32.totalorder %s48, %s62
      %p64 = scmp.eq.s32.totalorder %s17, 0
      %p65 = por %p63, %p64
      %s66 = ssub.s32 %s11, %s18
      %p67 = scmp.eq.s32.totalorder %s66, 0
      %s69 = sadd.s32 %s68, 1
      %s70 = scalar_select %p67, %s68, %s69
      %p73 = pneg %p67
      %p74 = scmp.eq.s32.totalorder %s11, 3
      %p75 = por %p73, %p74
      %p76 = scmp.ne.s32.totalorder %s68, %s71
      %p77 = scmp.eq.s32.totalorder %s11, 0
      %p78 = por %p76, %p77
      %p79 = scmp.ne.s32.totalorder %s68, %s71
      %p80 = scmp.eq.s32.totalorder %s16, 3
      %p81 = por %p79, %p80
      %p82 = scmp.ne.s32.totalorder %s71, %s72
      %p83 = scmp.eq.s32.totalorder %s16, 0
      %p84 = por %p82, %p83
      %p85 = scmp.ne.s32.totalorder %s71, %s72
      %p86 = scmp.eq.s32.totalorder %s17, 3
      %p87 = por %p85, %p86
      %p89 = scmp.ne.s32.totalorder %s72, %s88
      %p90 = scmp.eq.s32.totalorder %s17, 0
      %p91 = por %p89, %p90
      %p92 = scmp.le.s32.totalorder 1, %s11
      %p93 = scmp.lt.s32.totalorder %s11, 5
      %p94 = pnand %p92, %p93
      %p95 = pneg %p94
      // Predicated region
      $region9: #{head_forward.1} parent=5 // pred_check
        _
      $region10: #{head_forward.1} parent=5 // pred_check_branch
        %97 = sbr.rel (%p94) target = $region12
      $region11: #{head_forward.1} parent=5 // pred_region
        %s98 = ssub.s32 %s11, 1
        // Predicated region
        $region13: #{head_forward.1} parent=11 // pred_check
          %p99 = pneg %p58
        $region14: #{head_forward.1} parent=11 // pred_check_branch
          %101 = sbr.rel (%p99) target = $region16
        $region15: #{head_forward.1} parent=11 // pred_region
          _
        $region16: #{head_forward.1} parent=11 // pred_fallthru
          _
      $region12: #{head_forward.1} parent=5 // pred_fallthru
        _
      %p102 = scmp.lt.s32.totalorder %s11, 4
      // Predicated region
      $region17: #{head_forward.1} parent=5 // pred_check
        %p103 = pneg %p102
      $region18: #{head_forward.1} parent=5 // pred_check_branch
        %105 = sbr.rel (%p103) target = $region20
      $region19: #{head_forward.1} parent=5 // pred_region
        // Predicated region
        $region21: #{head_forward.1} parent=19 // pred_check
          %p106 = pneg %p31
        $region22: #{head_forward.1} parent=19 // pred_check_branch
          %108 = sbr.rel (%p106) target = $region24
        $region23: #{head_forward.1} parent=19 // pred_region
          %s109 = sand.u32 %s21, 1
          %s110 = scalar_lea.sflag [#allocation3], %s109
          %s111 = sand.u32 %s21, 1
          %s112 = smul.addr %s111, 768
          %s113 = scalar_lea.vmem [#allocation2], %s112
          %s114 = smul.u32 2, %s11
          %s116 = ssub.s32 12288, 12288
          %117 = vsyncadd %s110, %s116
          %s118 = smul.addr %s114, 48
          %s119 = smul.addr %s118, 128
          %s120 = scalar_lea.hbm %s0, %s119
          %s121 = sshll.u32 %s113, 4
          %s122 = int_to_ptr.vmem [resolvable:$true] %s121
          %127 = dma.hbm_to_vmem [thread:$0]  %s120, 12288, %s122, %s110, 384, 384, 24
        $region24: #{head_forward.1} parent=19 // pred_fallthru
          _
      $region20: #{head_forward.1} parent=5 // pred_fallthru
        _
      %p128 = scmp.le.s32.totalorder 1, %s11
      %p129 = scmp.lt.s32.totalorder %s11, 5
      %p130 = pnand %p128, %p129
      %p131 = pneg %p130
      // Predicated region
      $region25: #{head_forward.1} parent=5 // pred_check
        _
      $region26: #{head_forward.1} parent=5 // pred_check_branch
        %133 = sbr.rel (%p130) target = $region28
      $region27: #{head_forward.1} parent=5 // pred_region
        %s134 = ssub.s32 %s11, 1
        %s135 = sand.u32 %s24, 1
        %s136 = scalar_lea.sflag [#allocation3], %s135
        %s137 = sand.u32 %s24, 1
        %s138 = smul.addr %s137, 768
        %s139 = scalar_lea.vmem [#allocation2], %s138
        // Predicated region
        $region29: #{head_forward.1} parent=27 // pred_check
          %p140 = pneg %p37
        $region30: #{head_forward.1} parent=27 // pred_check_branch
          %142 = sbr.rel (%p140) target = $region32
        $region31: #{head_forward.1} parent=27 // pred_region
          %143 = dma.done %s136, 12288
        $region32: #{head_forward.1} parent=27 // pred_fallthru
          _
        %s144 = sand.u32 %s24, 1
        %s145 = scalar_lea.sflag [#allocation3], %s144
        %s146 = sand.u32 %s24, 1
        %s147 = smul.addr %s146, 768
        %s148 = scalar_lea.vmem [#allocation2], %s147
        %p149 = pneg %p37
        %p150 = pneg %p34
        %p151 = pneg %p58
        %p152 = pneg %p55
        %p153 = pneg %p84
        %p154 = pneg %p81
        %s155 = smul.u32 2, %s16
        %p156 = scmp.lt.s32.totalorder %s155, 7
        %s157 = scalar_select %p156, %s155, 7
        %s158 = smul.addr %s157, 16
        %s159 = smul.addr %s158, 8
        %s160 = scalar_lea.vmem %s2, %s159
        %s161 = smul.u32 2, %s16
        %s162 = smul.u32 2, %s16
        %p163 = scmp.lt.s32.totalorder %s162, 7
        %s164 = scalar_select %p163, %s162, 7
        %s165 = smul.addr %s164, 16
        %s166 = smul.addr %s165, 8
        %s167 = scalar_lea.vmem %s2, %s166
        %s168 = smul.u32 2, %s16
        %v170 = vld [vmem:[%s139] sm:$0xff]
        %v171 = vld [vmem:[%s139 + $0x8] sm:$0xff]
        %v172 = vld [vmem:[%s139 + $0x10] sm:$0xff]
        %v173 = vld [vmem:[%s139 + $0x18] sm:$0xff]
        %v174 = vld [vmem:[%s139 + $0x20] sm:$0xff]
        %v175 = vld [vmem:[%s139 + $0x28] sm:$0xff]
        %v176 = vld [vmem:[%s139 + $0x30] sm:$0xff]
        %v177 = vld [vmem:[%s139 + $0x38] sm:$0xff]
        %v178 = vld [vmem:[%s139 + $0x40] sm:$0xff]
        %v179 = vld [vmem:[%s139 + $0x48] sm:$0xff]
        %v180 = vld [vmem:[%s139 + $0x50] sm:$0xff]
        %v181 = vld [vmem:[%s139 + $0x58] sm:$0xff]
        %v182 = vld [vmem:[%s139 + $0x60] sm:$0xff]
        %v183 = vld [vmem:[%s139 + $0x68] sm:$0xff]
        %v184 = vld [vmem:[%s139 + $0x70] sm:$0xff]
        %v185 = vld [vmem:[%s139 + $0x78] sm:$0xff]
        %v186 = vld [vmem:[%s139 + $0x80] sm:$0xff]
        %v187 = vld [vmem:[%s139 + $0x88] sm:$0xff]
        %v188 = vld [vmem:[%s139 + $0x90] sm:$0xff]
        %v189 = vld [vmem:[%s139 + $0x98] sm:$0xff]
        %v190 = vld [vmem:[%s139 + $0xa0] sm:$0xff]
        %v191 = vld [vmem:[%s139 + $0xa8] sm:$0xff]
        %v192 = vld [vmem:[%s139 + $0xb0] sm:$0xff]
        %v193 = vld [vmem:[%s139 + $0xb8] sm:$0xff]
        %v194 = vld [vmem:[%s139 + $0xc0] sm:$0xff]
        %v195 = vld [vmem:[%s139 + $0xc8] sm:$0xff]
        %v196 = vld [vmem:[%s139 + $0xd0] sm:$0xff]
        %v197 = vld [vmem:[%s139 + $0xd8] sm:$0xff]
        %v198 = vld [vmem:[%s139 + $0xe0] sm:$0xff]
        %v199 = vld [vmem:[%s139 + $0xe8] sm:$0xff]
        %v200 = vld [vmem:[%s139 + $0xf0] sm:$0xff]
        %v201 = vld [vmem:[%s139 + $0xf8] sm:$0xff]
        %v202 = vld [vmem:[%s139 + $0x100] sm:$0xff]
        %v203 = vld [vmem:[%s139 + $0x108] sm:$0xff]
        %v204 = vld [vmem:[%s139 + $0x110] sm:$0xff]
        %v205 = vld [vmem:[%s139 + $0x118] sm:$0xff]
        %v206 = vld [vmem:[%s139 + $0x120] sm:$0xff]
        %v207 = vld [vmem:[%s139 + $0x128] sm:$0xff]
        %v208 = vld [vmem:[%s139 + $0x130] sm:$0xff]
        %v209 = vld [vmem:[%s139 + $0x138] sm:$0xff]
        %v210 = vld [vmem:[%s139 + $0x140] sm:$0xff]
        %v211 = vld [vmem:[%s139 + $0x148] sm:$0xff]
        %v212 = vld [vmem:[%s139 + $0x150] sm:$0xff]
        %v213 = vld [vmem:[%s139 + $0x158] sm:$0xff]
        %v214 = vld [vmem:[%s139 + $0x160] sm:$0xff]
        %v215 = vld [vmem:[%s139 + $0x168] sm:$0xff]
        %v216 = vld [vmem:[%s139 + $0x170] sm:$0xff]
        %v217 = vld [vmem:[%s139 + $0x178] sm:$0xff]
        %v218 = vld [vmem:[%s139 + $0x180] sm:$0xff]
        %v219 = vld [vmem:[%s139 + $0x188] sm:$0xff]
        %v220 = vld [vmem:[%s139 + $0x190] sm:$0xff]
        %v221 = vld [vmem:[%s139 + $0x198] sm:$0xff]
        %v222 = vld [vmem:[%s139 + $0x1a0] sm:$0xff]
        %v223 = vld [vmem:[%s139 + $0x1a8] sm:$0xff]
        %v224 = vld [vmem:[%s139 + $0x1b0] sm:$0xff]
        %v225 = vld [vmem:[%s139 + $0x1b8] sm:$0xff]
        %v226 = vld [vmem:[%s139 + $0x1c0] sm:$0xff]
        %v227 = vld [vmem:[%s139 + $0x1c8] sm:$0xff]
        %v228 = vld [vmem:[%s139 + $0x1d0] sm:$0xff]
        %v229 = vld [vmem:[%s139 + $0x1d8] sm:$0xff]
        %v230 = vld [vmem:[%s139 + $0x1e0] sm:$0xff]
        %v231 = vld [vmem:[%s139 + $0x1e8] sm:$0xff]
        %v232 = vld [vmem:[%s139 + $0x1f0] sm:$0xff]
        %v233 = vld [vmem:[%s139 + $0x1f8] sm:$0xff]
        %v234 = vld [vmem:[%s139 + $0x200] sm:$0xff]
        %v235 = vld [vmem:[%s139 + $0x208] sm:$0xff]
        %v236 = vld [vmem:[%s139 + $0x210] sm:$0xff]
        %v237 = vld [vmem:[%s139 + $0x218] sm:$0xff]
        %v238 = vld [vmem:[%s139 + $0x220] sm:$0xff]
        %v239 = vld [vmem:[%s139 + $0x228] sm:$0xff]
        %v240 = vld [vmem:[%s139 + $0x230] sm:$0xff]
        %v241 = vld [vmem:[%s139 + $0x238] sm:$0xff]
        %v242 = vld [vmem:[%s139 + $0x240] sm:$0xff]
        %v243 = vld [vmem:[%s139 + $0x248] sm:$0xff]
        %v244 = vld [vmem:[%s139 + $0x250] sm:$0xff]
        %v245 = vld [vmem:[%s139 + $0x258] sm:$0xff]
        %v246 = vld [vmem:[%s139 + $0x260] sm:$0xff]
        %v247 = vld [vmem:[%s139 + $0x268] sm:$0xff]
        %v248 = vld [vmem:[%s139 + $0x270] sm:$0xff]
        %v249 = vld [vmem:[%s139 + $0x278] sm:$0xff]
        %v250 = vld [vmem:[%s139 + $0x280] sm:$0xff]
        %v251 = vld [vmem:[%s139 + $0x288] sm:$0xff]
        %v252 = vld [vmem:[%s139 + $0x290] sm:$0xff]
        %v253 = vld [vmem:[%s139 + $0x298] sm:$0xff]
        %v254 = vld [vmem:[%s139 + $0x2a0] sm:$0xff]
        %v255 = vld [vmem:[%s139 + $0x2a8] sm:$0xff]
        %v256 = vld [vmem:[%s139 + $0x2b0] sm:$0xff]
        %v257 = vld [vmem:[%s139 + $0x2b8] sm:$0xff]
        %v258 = vld [vmem:[%s139 + $0x2c0] sm:$0xff]
        %v259 = vld [vmem:[%s139 + $0x2c8] sm:$0xff]
        %v260 = vld [vmem:[%s139 + $0x2d0] sm:$0xff]
        %v261 = vld [vmem:[%s139 + $0x2d8] sm:$0xff]
        %v262 = vld [vmem:[%s139 + $0x2e0] sm:$0xff]
        %v263 = vld [vmem:[%s139 + $0x2e8] sm:$0xff]
        %v264 = vld [vmem:[%s139 + $0x2f0] sm:$0xff]
        %v265 = vld [vmem:[%s139 + $0x2f8] sm:$0xff]
        %v266 = vpack.c.bf16 %v173, %v170
        %v267 = vpack.c.bf16 %v174, %v171
        %v268 = vpack.c.bf16 %v175, %v172
        %v269 = vpack.c.bf16 %v179, %v176
        %v270 = vpack.c.bf16 %v180, %v177
        %v271 = vpack.c.bf16 %v181, %v178
        %v272 = vpack.c.bf16 %v185, %v182
        %v273 = vpack.c.bf16 %v186, %v183
        %v274 = vpack.c.bf16 %v187, %v184
        %v275 = vpack.c.bf16 %v191, %v188
        %v276 = vpack.c.bf16 %v192, %v189
        %v277 = vpack.c.bf16 %v193, %v190
        %v278 = vpack.c.bf16 %v197, %v194
        %v279 = vpack.c.bf16 %v198, %v195
        %v280 = vpack.c.bf16 %v199, %v196
        %v281 = vpack.c.bf16 %v203, %v200
        %v282 = vpack.c.bf16 %v204, %v201
        %v283 = vpack.c.bf16 %v205, %v202
        %v284 = vpack.c.bf16 %v209, %v206
        %v285 = vpack.c.bf16 %v210, %v207
        %v286 = vpack.c.bf16 %v211, %v208
        %v287 = vpack.c.bf16 %v215, %v212
        %v288 = vpack.c.bf16 %v216, %v213
        %v289 = vpack.c.bf16 %v217, %v214
        %v290 = vpack.c.bf16 %v221, %v218
        %v291 = vpack.c.bf16 %v222, %v219
        %v292 = vpack.c.bf16 %v223, %v220
        %v293 = vpack.c.bf16 %v227, %v224
        %v294 = vpack.c.bf16 %v228, %v225
        %v295 = vpack.c.bf16 %v229, %v226
        %v296 = vpack.c.bf16 %v233, %v230
        %v297 = vpack.c.bf16 %v234, %v231
        %v298 = vpack.c.bf16 %v235, %v232
        %v299 = vpack.c.bf16 %v239, %v236
        %v300 = vpack.c.bf16 %v240, %v237
        %v301 = vpack.c.bf16 %v241, %v238
        %v302 = vpack.c.bf16 %v245, %v242
        %v303 = vpack.c.bf16 %v246, %v243
        %v304 = vpack.c.bf16 %v247, %v244
        %v305 = vpack.c.bf16 %v251, %v248
        %v306 = vpack.c.bf16 %v252, %v249
        %v307 = vpack.c.bf16 %v253, %v250
        %v308 = vpack.c.bf16 %v257, %v254
        %v309 = vpack.c.bf16 %v258, %v255
        %v310 = vpack.c.bf16 %v259, %v256
        %v311 = vpack.c.bf16 %v263, %v260
        %v312 = vpack.c.bf16 %v264, %v261
        %v313 = vpack.c.bf16 %v265, %v262
        %v314 = vld [vmem:[%s1] sm:$0xff]
        %v315 = vld [vmem:[%s1 + $0x8] sm:$0xf]
        %v316 = vld [vmem:[%s1 + $0xc] sm:$0xff]
        %v317 = vld [vmem:[%s1 + $0x14] sm:$0xf]
        %v318 = vld [vmem:[%s1 + $0x18] sm:$0xff]
        %v319 = vld [vmem:[%s1 + $0x20] sm:$0xf]
        %v320 = vld [vmem:[%s1 + $0x24] sm:$0xff]
        %v321 = vld [vmem:[%s1 + $0x2c] sm:$0xf]
        %v322 = vld [vmem:[%s1 + $0x30] sm:$0xff]
        %v323 = vld [vmem:[%s1 + $0x38] sm:$0xf]
        %v324 = vld [vmem:[%s1 + $0x3c] sm:$0xff]
        %v325 = vld [vmem:[%s1 + $0x44] sm:$0xf]
        %v326 = vld [vmem:[%s1 + $0x48] sm:$0xff]
        %v327 = vld [vmem:[%s1 + $0x50] sm:$0xf]
        %v328 = vld [vmem:[%s1 + $0x54] sm:$0xff]
        %v329 = vld [vmem:[%s1 + $0x5c] sm:$0xf]
        %v330 = vld [vmem:[%s1 + $0x60] sm:$0xff]
        %v331 = vld [vmem:[%s1 + $0x68] sm:$0xf]
        %v332 = vld [vmem:[%s1 + $0x6c] sm:$0xff]
        %v333 = vld [vmem:[%s1 + $0x74] sm:$0xf]
        %v334 = vld [vmem:[%s1 + $0x78] sm:$0xff]
        %v335 = vld [vmem:[%s1 + $0x80] sm:$0xf]
        %v336 = vld [vmem:[%s1 + $0x84] sm:$0xff]
        %v337 = vld [vmem:[%s1 + $0x8c] sm:$0xf]
        %v338 = vld [vmem:[%s1 + $0x90] sm:$0xff]
        %v339 = vld [vmem:[%s1 + $0x98] sm:$0xf]
        %v340 = vld [vmem:[%s1 + $0x9c] sm:$0xff]
        %v341 = vld [vmem:[%s1 + $0xa4] sm:$0xf]
        %v342 = vld [vmem:[%s1 + $0xa8] sm:$0xff]
        %v343 = vld [vmem:[%s1 + $0xb0] sm:$0xf]
        %v344 = vld [vmem:[%s1 + $0xb4] sm:$0xff]
        %v345 = vld [vmem:[%s1 + $0xbc] sm:$0xf]
        %v346 = vld [vmem:[%s1 + $0xc0] sm:$0xff]
        %v347 = vld [vmem:[%s1 + $0xc8] sm:$0xf]
        %v348 = vld [vmem:[%s1 + $0xcc] sm:$0xff]
        %v349 = vld [vmem:[%s1 + $0xd4] sm:$0xf]
        %v350 = vld [vmem:[%s1 + $0xd8] sm:$0xff]
        %v351 = vld [vmem:[%s1 + $0xe0] sm:$0xf]
        %v352 = vld [vmem:[%s1 + $0xe4] sm:$0xff]
        %v353 = vld [vmem:[%s1 + $0xec] sm:$0xf]
        %v354 = vld [vmem:[%s1 + $0xf0] sm:$0xff]
        %v355 = vld [vmem:[%s1 + $0xf8] sm:$0xf]
        %v356 = vld [vmem:[%s1 + $0xfc] sm:$0xff]
        %v357 = vld [vmem:[%s1 + $0x104] sm:$0xf]
        %v358 = vld [vmem:[%s1 + $0x108] sm:$0xff]
        %v359 = vld [vmem:[%s1 + $0x110] sm:$0xf]
        %v360 = vld [vmem:[%s1 + $0x114] sm:$0xff]
        %v361 = vld [vmem:[%s1 + $0x11c] sm:$0xf]
        %v362 = vld [vmem:[%s1 + $0x120] sm:$0xff]
        %v363 = vld [vmem:[%s1 + $0x128] sm:$0xf]
        %v364 = vld [vmem:[%s1 + $0x12c] sm:$0xff]
        %v365 = vld [vmem:[%s1 + $0x134] sm:$0xf]
        %v366 = vld [vmem:[%s1 + $0x138] sm:$0xff]
        %v367 = vld [vmem:[%s1 + $0x140] sm:$0xf]
        %v368 = vld [vmem:[%s1 + $0x144] sm:$0xff]
        %v369 = vld [vmem:[%s1 + $0x14c] sm:$0xf]
        %v370 = vld [vmem:[%s1 + $0x150] sm:$0xff]
        %v371 = vld [vmem:[%s1 + $0x158] sm:$0xf]
        %v372 = vld [vmem:[%s1 + $0x15c] sm:$0xff]
        %v373 = vld [vmem:[%s1 + $0x164] sm:$0xf]
        %v374 = vld [vmem:[%s1 + $0x168] sm:$0xff]
        %v375 = vld [vmem:[%s1 + $0x170] sm:$0xf]
        %v376 = vld [vmem:[%s1 + $0x174] sm:$0xff]
        %v377 = vld [vmem:[%s1 + $0x17c] sm:$0xf]
        %v378 = vld [vmem:[%s1 + $0x180] sm:$0xff]
        %v379 = vld [vmem:[%s1 + $0x188] sm:$0xf]
        %v380 = vld [vmem:[%s1 + $0x18c] sm:$0xff]
        %v381 = vld [vmem:[%s1 + $0x194] sm:$0xf]
        %v382 = vld [vmem:[%s1 + $0x198] sm:$0xff]
        %v383 = vld [vmem:[%s1 + $0x1a0] sm:$0xf]
        %v384 = vld [vmem:[%s1 + $0x1a4] sm:$0xff]
        %v385 = vld [vmem:[%s1 + $0x1ac] sm:$0xf]
        %v386 = vld [vmem:[%s1 + $0x1b0] sm:$0xff]
        %v387 = vld [vmem:[%s1 + $0x1b8] sm:$0xf]
        %v388 = vld [vmem:[%s1 + $0x1bc] sm:$0xff]
        %v389 = vld [vmem:[%s1 + $0x1c4] sm:$0xf]
        %v390 = vld [vmem:[%s1 + $0x1c8] sm:$0xff]
        %v391 = vld [vmem:[%s1 + $0x1d0] sm:$0xf]
        %v392 = vld [vmem:[%s1 + $0x1d4] sm:$0xff]
        %v393 = vld [vmem:[%s1 + $0x1dc] sm:$0xf]
        %v394 = vld [vmem:[%s1 + $0x1e0] sm:$0xff]
        %v395 = vld [vmem:[%s1 + $0x1e8] sm:$0xf]
        %v396 = vld [vmem:[%s1 + $0x1ec] sm:$0xff]
        %v397 = vld [vmem:[%s1 + $0x1f4] sm:$0xf]
        %v398 = vld [vmem:[%s1 + $0x1f8] sm:$0xff]
        %v399 = vld [vmem:[%s1 + $0x200] sm:$0xf]
        %v400 = vld [vmem:[%s1 + $0x204] sm:$0xff]
        %v401 = vld [vmem:[%s1 + $0x20c] sm:$0xf]
        %v402 = vld [vmem:[%s1 + $0x210] sm:$0xff]
        %v403 = vld [vmem:[%s1 + $0x218] sm:$0xf]
        %v404 = vld [vmem:[%s1 + $0x21c] sm:$0xff]
        %v405 = vld [vmem:[%s1 + $0x224] sm:$0xf]
        %v406 = vld [vmem:[%s1 + $0x228] sm:$0xff]
        %v407 = vld [vmem:[%s1 + $0x230] sm:$0xf]
        %v408 = vld [vmem:[%s1 + $0x234] sm:$0xff]
        %v409 = vld [vmem:[%s1 + $0x23c] sm:$0xf]
        %v506 = vunpack.c.l.b16 %v314
        %v507 = vunpack.c.h.b16 %v314
        %v508 = vunpack.c.l.b16 %v315
        %v509 = vunpack.c.l.b16 %v316
        %v510 = vunpack.c.h.b16 %v316
        %v511 = vunpack.c.l.b16 %v317
        %v512 = vunpack.c.l.b16 %v318
        %v513 = vunpack.c.h.b16 %v318
        %v514 = vunpack.c.l.b16 %v319
        %v515 = vunpack.c.l.b16 %v320
        %v516 = vunpack.c.h.b16 %v320
        %v517 = vunpack.c.l.b16 %v321
        %v518 = vunpack.c.l.b16 %v322
        %v519 = vunpack.c.h.b16 %v322
        %v520 = vunpack.c.l.b16 %v323
        %v521 = vunpack.c.l.b16 %v324
        %v522 = vunpack.c.h.b16 %v324
        %v523 = vunpack.c.l.b16 %v325
        %v524 = vunpack.c.l.b16 %v326
        %v525 = vunpack.c.h.b16 %v326
        %v526 = vunpack.c.l.b16 %v327
        %v527 = vunpack.c.l.b16 %v328
        %v528 = vunpack.c.h.b16 %v328
        %v529 = vunpack.c.l.b16 %v329
        %v530 = vunpack.c.l.b16 %v330
        %v531 = vunpack.c.h.b16 %v330
        %v532 = vunpack.c.l.b16 %v331
        %v533 = vunpack.c.l.b16 %v332
        %v534 = vunpack.c.h.b16 %v332
        %v535 = vunpack.c.l.b16 %v333
        %v536 = vunpack.c.l.b16 %v334
        %v537 = vunpack.c.h.b16 %v334
        %v538 = vunpack.c.l.b16 %v335
        %v539 = vunpack.c.l.b16 %v336
        %v540 = vunpack.c.h.b16 %v336
        %v541 = vunpack.c.l.b16 %v337
        %v542 = vunpack.c.l.b16 %v338
        %v543 = vunpack.c.h.b16 %v338
        %v544 = vunpack.c.l.b16 %v339
        %v545 = vunpack.c.l.b16 %v340
        %v546 = vunpack.c.h.b16 %v340
        %v547 = vunpack.c.l.b16 %v341
        %v548 = vunpack.c.l.b16 %v342
        %v549 = vunpack.c.h.b16 %v342
        %v550 = vunpack.c.l.b16 %v343
        %v551 = vunpack.c.l.b16 %v344
        %v552 = vunpack.c.h.b16 %v344
        %v553 = vunpack.c.l.b16 %v345
        %v554 = vunpack.c.l.b16 %v346
        %v555 = vunpack.c.h.b16 %v346
        %v556 = vunpack.c.l.b16 %v347
        %v557 = vunpack.c.l.b16 %v348
        %v558 = vunpack.c.h.b16 %v348
        %v559 = vunpack.c.l.b16 %v349
        %v560 = vunpack.c.l.b16 %v350
        %v561 = vunpack.c.h.b16 %v350
        %v562 = vunpack.c.l.b16 %v351
        %v563 = vunpack.c.l.b16 %v352
        %v564 = vunpack.c.h.b16 %v352
        %v565 = vunpack.c.l.b16 %v353
        %v566 = vunpack.c.l.b16 %v354
        %v567 = vunpack.c.h.b16 %v354
        %v568 = vunpack.c.l.b16 %v355
        %v569 = vunpack.c.l.b16 %v356
        %v570 = vunpack.c.h.b16 %v356
        %v571 = vunpack.c.l.b16 %v357
        %v572 = vunpack.c.l.b16 %v358
        %v573 = vunpack.c.h.b16 %v358
        %v574 = vunpack.c.l.b16 %v359
        %v575 = vunpack.c.l.b16 %v360
        %v576 = vunpack.c.h.b16 %v360
        %v577 = vunpack.c.l.b16 %v361
        %v578 = vunpack.c.l.b16 %v362
        %v579 = vunpack.c.h.b16 %v362
        %v580 = vunpack.c.l.b16 %v363
        %v581 = vunpack.c.l.b16 %v364
        %v582 = vunpack.c.h.b16 %v364
        %v583 = vunpack.c.l.b16 %v365
        %v584 = vunpack.c.l.b16 %v366
        %v585 = vunpack.c.h.b16 %v366
        %v586 = vunpack.c.l.b16 %v367
        %v587 = vunpack.c.l.b16 %v368
        %v588 = vunpack.c.h.b16 %v368
        %v589 = vunpack.c.l.b16 %v369
        %v590 = vunpack.c.l.b16 %v370
        %v591 = vunpack.c.h.b16 %v370
        %v592 = vunpack.c.l.b16 %v371
        %v593 = vunpack.c.l.b16 %v372
        %v594 = vunpack.c.h.b16 %v372
        %v595 = vunpack.c.l.b16 %v373
        %v596 = vunpack.c.l.b16 %v374
        %v597 = vunpack.c.h.b16 %v374
        %v598 = vunpack.c.l.b16 %v375
        %v599 = vunpack.c.l.b16 %v376
        %v600 = vunpack.c.h.b16 %v376
        %v601 = vunpack.c.l.b16 %v377
        %v602 = vunpack.c.l.b16 %v378
        %v603 = vunpack.c.h.b16 %v378
        %v604 = vunpack.c.l.b16 %v379
        %v605 = vunpack.c.l.b16 %v380
        %v606 = vunpack.c.h.b16 %v380
        %v607 = vunpack.c.l.b16 %v381
        %v608 = vunpack.c.l.b16 %v382
        %v609 = vunpack.c.h.b16 %v382
        %v610 = vunpack.c.l.b16 %v383
        %v611 = vunpack.c.l.b16 %v384
        %v612 = vunpack.c.h.b16 %v384
        %v613 = vunpack.c.l.b16 %v385
        %v614 = vunpack.c.l.b16 %v386
        %v615 = vunpack.c.h.b16 %v386
        %v616 = vunpack.c.l.b16 %v387
        %v617 = vunpack.c.l.b16 %v388
        %v618 = vunpack.c.h.b16 %v388
        %v619 = vunpack.c.l.b16 %v389
        %v620 = vunpack.c.l.b16 %v390
        %v621 = vunpack.c.h.b16 %v390
        %v622 = vunpack.c.l.b16 %v391
        %v623 = vunpack.c.l.b16 %v392
        %v624 = vunpack.c.h.b16 %v392
        %v625 = vunpack.c.l.b16 %v393
        %v626 = vunpack.c.l.b16 %v394
        %v627 = vunpack.c.h.b16 %v394
        %v628 = vunpack.c.l.b16 %v395
        %v629 = vunpack.c.l.b16 %v396
        %v630 = vunpack.c.h.b16 %v396
        %v631 = vunpack.c.l.b16 %v397
        %v632 = vunpack.c.l.b16 %v398
        %v633 = vunpack.c.h.b16 %v398
        %v634 = vunpack.c.l.b16 %v399
        %v635 = vunpack.c.l.b16 %v400
        %v636 = vunpack.c.h.b16 %v400
        %v637 = vunpack.c.l.b16 %v401
        %v638 = vunpack.c.l.b16 %v402
        %v639 = vunpack.c.h.b16 %v402
        %v640 = vunpack.c.l.b16 %v403
        %v641 = vunpack.c.l.b16 %v404
        %v642 = vunpack.c.h.b16 %v404
        %v643 = vunpack.c.l.b16 %v405
        %v644 = vunpack.c.l.b16 %v406
        %v645 = vunpack.c.h.b16 %v406
        %v646 = vunpack.c.l.b16 %v407
        %v647 = vunpack.c.l.b16 %v408
        %v648 = vunpack.c.h.b16 %v408
        %v649 = vunpack.c.l.b16 %v409
        %v650 = vpack.c.b16 %v509, %v506
        %v651 = vpack.c.b16 %v510, %v507
        %v652 = vpack.c.b16 %v511, %v508
        %v653 = vpack.c.b16 %v515, %v512
        %v654 = vpack.c.b16 %v516, %v513
        %v655 = vpack.c.b16 %v517, %v514
        %v656 = vpack.c.b16 %v521, %v518
        %v657 = vpack.c.b16 %v522, %v519
        %v658 = vpack.c.b16 %v523, %v520
        %v659 = vpack.c.b16 %v527, %v524
        %v660 = vpack.c.b16 %v528, %v525
        %v661 = vpack.c.b16 %v529, %v526
        %v662 = vpack.c.b16 %v533, %v530
        %v663 = vpack.c.b16 %v534, %v531
        %v664 = vpack.c.b16 %v535, %v532
        %v665 = vpack.c.b16 %v539, %v536
        %v666 = vpack.c.b16 %v540, %v537
        %v667 = vpack.c.b16 %v541, %v538
        %v668 = vpack.c.b16 %v545, %v542
        %v669 = vpack.c.b16 %v546, %v543
        %v670 = vpack.c.b16 %v547, %v544
        %v671 = vpack.c.b16 %v551, %v548
        %v672 = vpack.c.b16 %v552, %v549
        %v673 = vpack.c.b16 %v553, %v550
        %v674 = vpack.c.b16 %v557, %v554
        %v675 = vpack.c.b16 %v558, %v555
        %v676 = vpack.c.b16 %v559, %v556
        %v677 = vpack.c.b16 %v563, %v560
        %v678 = vpack.c.b16 %v564, %v561
        %v679 = vpack.c.b16 %v565, %v562
        %v680 = vpack.c.b16 %v569, %v566
        %v681 = vpack.c.b16 %v570, %v567
        %v682 = vpack.c.b16 %v571, %v568
        %v683 = vpack.c.b16 %v575, %v572
        %v684 = vpack.c.b16 %v576, %v573
        %v685 = vpack.c.b16 %v577, %v574
        %v686 = vpack.c.b16 %v581, %v578
        %v687 = vpack.c.b16 %v582, %v579
        %v688 = vpack.c.b16 %v583, %v580
        %v689 = vpack.c.b16 %v587, %v584
        %v690 = vpack.c.b16 %v588, %v585
        %v691 = vpack.c.b16 %v589, %v586
        %v692 = vpack.c.b16 %v593, %v590
        %v693 = vpack.c.b16 %v594, %v591
        %v694 = vpack.c.b16 %v595, %v592
        %v695 = vpack.c.b16 %v599, %v596
        %v696 = vpack.c.b16 %v600, %v597
        %v697 = vpack.c.b16 %v601, %v598
        %v698 = vpack.c.b16 %v605, %v602
        %v699 = vpack.c.b16 %v606, %v603
        %v700 = vpack.c.b16 %v607, %v604
        %v701 = vpack.c.b16 %v611, %v608
        %v702 = vpack.c.b16 %v612, %v609
        %v703 = vpack.c.b16 %v613, %v610
        %v704 = vpack.c.b16 %v617, %v614
        %v705 = vpack.c.b16 %v618, %v615
        %v706 = vpack.c.b16 %v619, %v616
        %v707 = vpack.c.b16 %v623, %v620
        %v708 = vpack.c.b16 %v624, %v621
        %v709 = vpack.c.b16 %v625, %v622
        %v710 = vpack.c.b16 %v629, %v626
        %v711 = vpack.c.b16 %v630, %v627
        %v712 = vpack.c.b16 %v631, %v628
        %v713 = vpack.c.b16 %v635, %v632
        %v714 = vpack.c.b16 %v636, %v633
        %v715 = vpack.c.b16 %v637, %v634
        %v716 = vpack.c.b16 %v641, %v638
        %v717 = vpack.c.b16 %v642, %v639
        %v718 = vpack.c.b16 %v643, %v640
        %v719 = vpack.c.b16 %v647, %v644
        %v720 = vpack.c.b16 %v648, %v645
        %v721 = vpack.c.b16 %v649, %v646
        %794 = vmatprep.subr.bf16.mxu0 %v651
        %795 = vmatpush1.bf16.msra.mxu0 %v650
        %796 = vmatprep.subr.bf16.mxu0 %v654
        %797 = vmatpush1.bf16.msra.mxu0 %v653
        %798 = vmatprep.subr.bf16.mxu0 %v657
        %799 = vmatpush1.bf16.msra.mxu0 %v656
        %800 = vmatprep.subr.bf16.mxu0 %v660
        %801 = vmatpush1.bf16.msra.mxu0 %v659
        %802 = vmatprep.subr.bf16.mxu0 %v663
        %803 = vmatpush1.bf16.msra.mxu0 %v662
        %804 = vmatprep.subr.bf16.mxu0 %v666
        %805 = vmatpush1.bf16.msra.mxu0 %v665
        %806 = vmatprep.subr.bf16.mxu0 %v669
        %807 = vmatpush1.bf16.msra.mxu0 %v668
        %808 = vmatprep.subr.bf16.mxu0 %v672
        %809 = vmatpush1.bf16.msra.mxu0 %v671
        %810 = vmatprep.subr.bf16.mxu0 %v675
        %811 = vmatpush1.bf16.msra.mxu0 %v674
        %812 = vmatprep.subr.bf16.mxu0 %v678
        %813 = vmatpush1.bf16.msra.mxu0 %v677
        %814 = vmatprep.subr.bf16.mxu0 %v681
        %815 = vmatpush1.bf16.msra.mxu0 %v680
        %816 = vmatprep.subr.bf16.mxu0 %v684
        %817 = vmatpush1.bf16.msra.mxu0 %v683
        %818 = vmatprep.subr.bf16.mxu0 %v687
        %819 = vmatpush1.bf16.msra.mxu0 %v686
        %820 = vmatprep.subr.bf16.mxu0 %v690
        %821 = vmatpush1.bf16.msra.mxu0 %v689
        %822 = vmatprep.subr.bf16.mxu0 %v693
        %823 = vmatpush1.bf16.msra.mxu0 %v692
        %824 = vmatprep.subr.bf16.mxu0 %v696
        %825 = vmatpush1.bf16.msra.mxu0 %v695
        %826 = vmatprep.mubr.bf16.mxu0 %v267
        %827 = vmatmul.mubr.bf16.gmra.mrb[0].mxu0 %v266
        %v828 = vpop.f32.mrb[0].mxu0
        %v829 = vadd.f32 0.0, %v828
        %v830 = vpop.f32.mrb[0].mxu0
        %v831 = vadd.f32 0.0, %v830
        %v832 = vpop.f32.mrb[0].mxu0
        %v833 = vadd.f32 0.0, %v832
        %v834 = vpop.f32.mrb[0].mxu0
        %v835 = vadd.f32 0.0, %v834
        %836 = vmatprep.mubr.bf16.mxu0 %v270
        %837 = vmatmul.mubr.bf16.gmra.mrb[0].mxu0 %v269
        %v838 = vpop.f32.mrb[0].mxu0
        %v839 = vadd.f32 0.0, %v838
        %v840 = vpop.f32.mrb[0].mxu0
        %v841 = vadd.f32 0.0, %v840
        %v842 = vpop.f32.mrb[0].mxu0
        %v843 = vadd.f32 0.0, %v842
        %v844 = vpop.f32.mrb[0].mxu0
        %v845 = vadd.f32 0.0, %v844
        %846 = vmatprep.mubr.bf16.mxu0 %v273
        %847 = vmatmul.mubr.bf16.gmra.mrb[0].mxu0 %v272
        %v848 = vpop.f32.mrb[0].mxu0
        %v849 = vadd.f32 0.0, %v848
        %v850 = vpop.f32.mrb[0].mxu0
        %v851 = vadd.f32 0.0, %v850
        %v852 = vpop.f32.mrb[0].mxu0
        %v853 = vadd.f32 0.0, %v852
        %v854 = vpop.f32.mrb[0].mxu0
        %v855 = vadd.f32 0.0, %v854
        %856 = vmatprep.mubr.bf16.mxu0 %v276
        %857 = vmatmul.mubr.bf16.gmra.mrb[0].mxu0 %v275
        %v858 = vpop.f32.mrb[0].mxu0
        %v859 = vadd.f32 0.0, %v858
        %v860 = vpop.f32.mrb[0].mxu0
        %v861 = vadd.f32 0.0, %v860
        %v862 = vpop.f32.mrb[0].mxu0
        %v863 = vadd.f32 0.0, %v862
        %v864 = vpop.f32.mrb[0].mxu0
        %v865 = vadd.f32 0.0, %v864
        %866 = vmatprep.mubr.bf16.mxu0 %v279
        %867 = vmatmul.mubr.bf16.gmra.mrb[0].mxu0 %v278
        %v868 = vpop.f32.mrb[0].mxu0
        %v869 = vadd.f32 0.0, %v868
        %v870 = vpop.f32.mrb[0].mxu0
        %v871 = vadd.f32 0.0, %v870
        %v872 = vpop.f32.mrb[0].mxu0
        %v873 = vadd.f32 0.0, %v872
        %v874 = vpop.f32.mrb[0].mxu0
        %v875 = vadd.f32 0.0, %v874
        %876 = vmatprep.mubr.bf16.mxu0 %v282
        %877 = vmatmul.mubr.bf16.gmra.mrb[0].mxu0 %v281
        %v878 = vpop.f32.mrb[0].mxu0
        %v879 = vadd.f32 0.0, %v878
        %v880 = vpop.f32.mrb[0].mxu0
        %v881 = vadd.f32 0.0, %v880
        %v882 = vpop.f32.mrb[0].mxu0
        %v883 = vadd.f32 0.0, %v882
        %v884 = vpop.f32.mrb[0].mxu0
        %v885 = vadd.f32 0.0, %v884
        %886 = vmatprep.mubr.bf16.mxu0 %v285
        %887 = vmatmul.mubr.bf16.gmra.mrb[0].mxu0 %v284
        %v888 = vpop.f32.mrb[0].mxu0
        %v889 = vadd.f32 0.0, %v888
        %v890 = vpop.f32.mrb[0].mxu0
        %v891 = vadd.f32 0.0, %v890
        %v892 = vpop.f32.mrb[0].mxu0
        %v893 = vadd.f32 0.0, %v892
        %v894 = vpop.f32.mrb[0].mxu0
        %v895 = vadd.f32 0.0, %v894
        %896 = vmatprep.mubr.bf16.mxu0 %v288
        %897 = vmatmul.mubr.bf16.gmra.mrb[0].mxu0 %v287
        %v898 = vpop.f32.mrb[0].mxu0
        %v899 = vadd.f32 0.0, %v898
        %v900 = vpop.f32.mrb[0].mxu0
        %v901 = vadd.f32 0.0, %v900
        %v902 = vpop.f32.mrb[0].mxu0
        %v903 = vadd.f32 0.0, %v902
        %v904 = vpop.f32.mrb[0].mxu0
        %v905 = vadd.f32 0.0, %v904
        %906 = vmatprep.mubr.bf16.mxu0 %v291
        %907 = vmatmul.mubr.bf16.gmra.mrb[0].mxu0 %v290
        %v908 = vpop.f32.mrb[0].mxu0
        %v909 = vadd.f32 0.0, %v908
        %v910 = vpop.f32.mrb[0].mxu0
        %v911 = vadd.f32 0.0, %v910
        %v912 = vpop.f32.mrb[0].mxu0
        %v913 = vadd.f32 0.0, %v912
        %v914 = vpop.f32.mrb[0].mxu0
        %v915 = vadd.f32 0.0, %v914
        %916 = vmatprep.mubr.bf16.mxu0 %v294
        %917 = vmatmul.mubr.bf16.gmra.mrb[0].mxu0 %v293
        %v918 = vpop.f32.mrb[0].mxu0
        %v919 = vadd.f32 0.0, %v918
        %v920 = vpop.f32.mrb[0].mxu0
        %v921 = vadd.f32 0.0, %v920
        %v922 = vpop.f32.mrb[0].mxu0
        %v923 = vadd.f32 0.0, %v922
        %v924 = vpop.f32.mrb[0].mxu0
        %v925 = vadd.f32 0.0, %v924
        %926 = vmatprep.mubr.bf16.mxu0 %v297
        %927 = vmatmul.mubr.bf16.gmra.mrb[0].mxu0 %v296
        %v928 = vpop.f32.mrb[0].mxu0
        %v929 = vadd.f32 0.0, %v928
        %v930 = vpop.f32.mrb[0].mxu0
        %v931 = vadd.f32 0.0, %v930
        %v932 = vpop.f32.mrb[0].mxu0
        %v933 = vadd.f32 0.0, %v932
        %v934 = vpop.f32.mrb[0].mxu0
        %v935 = vadd.f32 0.0, %v934
        %936 = vmatprep.mubr.bf16.mxu0 %v300
        %937 = vmatmul.mubr.bf16.gmra.mrb[0].mxu0 %v299
        %v938 = vpop.f32.mrb[0].mxu0
        %v939 = vadd.f32 0.0, %v938
        %v940 = vpop.f32.mrb[0].mxu0
        %v941 = vadd.f32 0.0, %v940
        %v942 = vpop.f32.mrb[0].mxu0
        %v943 = vadd.f32 0.0, %v942
        %v944 = vpop.f32.mrb[0].mxu0
        %v945 = vadd.f32 0.0, %v944
        %946 = vmatprep.mubr.bf16.mxu0 %v303
        %947 = vmatmul.mubr.bf16.gmra.mrb[0].mxu0 %v302
        %v948 = vpop.f32.mrb[0].mxu0
        %v949 = vadd.f32 0.0, %v948
        %v950 = vpop.f32.mrb[0].mxu0
        %v951 = vadd.f32 0.0, %v950
        %v952 = vpop.f32.mrb[0].mxu0
        %v953 = vadd.f32 0.0, %v952
        %v954 = vpop.f32.mrb[0].mxu0
        %v955 = vadd.f32 0.0, %v954
        %956 = vmatprep.mubr.bf16.mxu0 %v306
        %957 = vmatmul.mubr.bf16.gmra.mrb[0].mxu0 %v305
        %v958 = vpop.f32.mrb[0].mxu0
        %v959 = vadd.f32 0.0, %v958
        %v960 = vpop.f32.mrb[0].mxu0
        %v961 = vadd.f32 0.0, %v960
        %v962 = vpop.f32.mrb[0].mxu0
        %v963 = vadd.f32 0.0, %v962
        %v964 = vpop.f32.mrb[0].mxu0
        %v965 = vadd.f32 0.0, %v964
        %966 = vmatprep.mubr.bf16.mxu0 %v309
        %967 = vmatmul.mubr.bf16.gmra.mrb[0].mxu0 %v308
        %v968 = vpop.f32.mrb[0].mxu0
        %v969 = vadd.f32 0.0, %v968
        %v970 = vpop.f32.mrb[0].mxu0
        %v971 = vadd.f32 0.0, %v970
        %v972 = vpop.f32.mrb[0].mxu0
        %v973 = vadd.f32 0.0, %v972
        %v974 = vpop.f32.mrb[0].mxu0
        %v975 = vadd.f32 0.0, %v974
        %976 = vmatprep.mubr.bf16.mxu0 %v312
        %977 = vmatmul.mubr.bf16.gmra.mrb[0].mxu0 %v311
        %v978 = vpop.f32.mrb[0].mxu0
        %v979 = vadd.f32 0.0, %v978
        %v980 = vpop.f32.mrb[0].mxu0
        %v981 = vadd.f32 0.0, %v980
        %v982 = vpop.f32.mrb[0].mxu0
        %v983 = vadd.f32 0.0, %v982
        %v984 = vpop.f32.mrb[0].mxu0
        %v985 = vadd.f32 0.0, %v984
        %986 = vdwg.mxu0
        %987 = vmatprep.subr.bf16.mxu0 %v699
        %988 = vmatpush1.bf16.msra.mxu0 %v698
        %989 = vmatprep.subr.bf16.mxu0 %v702
        %990 = vmatpush1.bf16.msra.mxu0 %v701
        %991 = vmatprep.subr.bf16.mxu0 %v705
        %992 = vmatpush1.bf16.msra.mxu0 %v704
        %993 = vmatprep.subr.bf16.mxu0 %v708
        %994 = vmatpush1.bf16.msra.mxu0 %v707
        %995 = vmatprep.subr.bf16.mxu0 %v711
        %996 = vmatpush1.bf16.msra.mxu0 %v710
        %997 = vmatprep.subr.bf16.mxu0 %v714
        %998 = vmatpush1.bf16.msra.mxu0 %v713
        %999 = vmatprep.subr.bf16.mxu0 %v717
        %1000 = vmatpush1.bf16.msra.mxu0 %v716
        %1001 = vmatprep.subr.bf16.mxu0 %v720
        %1002 = vmatpush1.bf16.msra.mxu0 %v719
        %1003 = vmatprep.subr.bf16.mxu0 0
        %1004 = vmatpush1.bf16.msra.mxu0 0
        %1005 = vmatprep.subr.bf16.mxu0 0
        %1006 = vmatpush1.bf16.msra.mxu0 0
        %1007 = vmatprep.subr.bf16.mxu0 0
        %1008 = vmatpush1.bf16.msra.mxu0 0
        %1009 = vmatprep.subr.bf16.mxu0 0
        %1010 = vmatpush1.bf16.msra.mxu0 0
        %1011 = vmatprep.subr.bf16.mxu0 0
        %1012 = vmatpush1.bf16.msra.mxu0 0
        %1013 = vmatprep.subr.bf16.mxu0 0
        %1014 = vmatpush1.bf16.msra.mxu0 0
        %1015 = vmatprep.subr.bf16.mxu0 0
        %1016 = vmatpush1.bf16.msra.mxu0 0
        %1017 = vmatprep.subr.bf16.mxu0 0
        %1018 = vmatpush1.bf16.msra.mxu0 0
        %1019 = vmatprep.mubr.bf16.mxu0 0
        %1020 = vmatmul.mubr.bf16.gmra.mrb[0].mxu0 %v268
        %v1021 = vpop.f32.mrb[0].mxu0
        %v1022 = vadd.f32 %v829, %v1021
        %v1023 = vpop.f32.mrb[0].mxu0
        %v1024 = vadd.f32 %v831, %v1023
        %v1025 = vpop.f32.mrb[0].mxu0
        %v1026 = vadd.f32 %v833, %v1025
        %v1027 = vpop.f32.mrb[0].mxu0
        %v1028 = vadd.f32 %v835, %v1027
        %1029 = vmatprep.mubr.bf16.mxu0 0
        %1030 = vmatmul.mubr.bf16.gmra.mrb[0].mxu0 %v271
        %v1031 = vpop.f32.mrb[0].mxu0
        %v1032 = vadd.f32 %v839, %v1031
        %v1033 = vpop.f32.mrb[0].mxu0
        %v1034 = vadd.f32 %v841, %v1033
        %v1035 = vpop.f32.mrb[0].mxu0
        %v1036 = vadd.f32 %v843, %v1035
        %v1037 = vpop.f32.mrb[0].mxu0
        %v1038 = vadd.f32 %v845, %v1037
        %1039 = vmatprep.mubr.bf16.mxu0 0
        %1040 = vmatmul.mubr.bf16.gmra.mrb[0].mxu0 %v274
        %v1041 = vpop.f32.mrb[0].mxu0
        %v1042 = vadd.f32 %v849, %v1041
        %v1043 = vpop.f32.mrb[0].mxu0
        %v1044 = vadd.f32 %v851, %v1043
        %v1045 = vpop.f32.mrb[0].mxu0
        %v1046 = vadd.f32 %v853, %v1045
        %v1047 = vpop.f32.mrb[0].mxu0
        %v1048 = vadd.f32 %v855, %v1047
        %1049 = vmatprep.mubr.bf16.mxu0 0
        %1050 = vmatmul.mubr.bf16.gmra.mrb[0].mxu0 %v277
        %v1051 = vpop.f32.mrb[0].mxu0
        %v1052 = vadd.f32 %v859, %v1051
        %v1053 = vpop.f32.mrb[0].mxu0
        %v1054 = vadd.f32 %v861, %v1053
        %v1055 = vpop.f32.mrb[0].mxu0
        %v1056 = vadd.f32 %v863, %v1055
        %v1057 = vpop.f32.mrb[0].mxu0
        %v1058 = vadd.f32 %v865, %v1057
        %1059 = vmatprep.mubr.bf16.mxu0 0
        %1060 = vmatmul.mubr.bf16.gmra.mrb[0].mxu0 %v280
        %v1061 = vpop.f32.mrb[0].mxu0
        %v1062 = vadd.f32 %v869, %v1061
        %v1063 = vpop.f32.mrb[0].mxu0
        %v1064 = vadd.f32 %v871, %v1063
        %v1065 = vpop.f32.mrb[0].mxu0
        %v1066 = vadd.f32 %v873, %v1065
        %v1067 = vpop.f32.mrb[0].mxu0
        %v1068 = vadd.f32 %v875, %v1067
        %1069 = vmatprep.mubr.bf16.mxu0 0
        %1070 = vmatmul.mubr.bf16.gmra.mrb[0].mxu0 %v283
        %v1071 = vpop.f32.mrb[0].mxu0
        %v1072 = vadd.f32 %v879, %v1071
        %v1073 = vpop.f32.mrb[0].mxu0
        %v1074 = vadd.f32 %v881, %v1073
        %v1075 = vpop.f32.mrb[0].mxu0
        %v1076 = vadd.f32 %v883, %v1075
        %v1077 = vpop.f32.mrb[0].mxu0
        %v1078 = vadd.f32 %v885, %v1077
        %1079 = vmatprep.mubr.bf16.mxu0 0
        %1080 = vmatmul.mubr.bf16.gmra.mrb[0].mxu0 %v286
        %v1081 = vpop.f32.mrb[0].mxu0
        %v1082 = vadd.f32 %v889, %v1081
        %v1083 = vpop.f32.mrb[0].mxu0
        %v1084 = vadd.f32 %v891, %v1083
        %v1085 = vpop.f32.mrb[0].mxu0
        %v1086 = vadd.f32 %v893, %v1085
        %v1087 = vpop.f32.mrb[0].mxu0
        %v1088 = vadd.f32 %v895, %v1087
        %1089 = vmatprep.mubr.bf16.mxu0 0
        %1090 = vmatmul.mubr.bf16.gmra.mrb[0].mxu0 %v289
        %v1091 = vpop.f32.mrb[0].mxu0
        %v1092 = vadd.f32 %v899, %v1091
        %v1093 = vpop.f32.mrb[0].mxu0
        %v1094 = vadd.f32 %v901, %v1093
        %v1095 = vpop.f32.mrb[0].mxu0
        %v1096 = vadd.f32 %v903, %v1095
        %v1097 = vpop.f32.mrb[0].mxu0
        %v1098 = vadd.f32 %v905, %v1097
        %1099 = vmatprep.mubr.bf16.mxu0 0
        %1100 = vmatmul.mubr.bf16.gmra.mrb[0].mxu0 %v292
        %v1101 = vpop.f32.mrb[0].mxu0
        %v1102 = vadd.f32 %v909, %v1101
        %v1103 = vpop.f32.mrb[0].mxu0
        %v1104 = vadd.f32 %v911, %v1103
        %v1105 = vpop.f32.mrb[0].mxu0
        %v1106 = vadd.f32 %v913, %v1105
        %v1107 = vpop.f32.mrb[0].mxu0
        %v1108 = vadd.f32 %v915, %v1107
        %1109 = vmatprep.mubr.bf16.mxu0 0
        %1110 = vmatmul.mubr.bf16.gmra.mrb[0].mxu0 %v295
        %v1111 = vpop.f32.mrb[0].mxu0
        %v1112 = vadd.f32 %v919, %v1111
        %v1113 = vpop.f32.mrb[0].mxu0
        %v1114 = vadd.f32 %v921, %v1113
        %v1115 = vpop.f32.mrb[0].mxu0
        %v1116 = vadd.f32 %v923, %v1115
        %v1117 = vpop.f32.mrb[0].mxu0
        %v1118 = vadd.f32 %v925, %v1117
        %1119 = vmatprep.mubr.bf16.mxu0 0
        %1120 = vmatmul.mubr.bf16.gmra.mrb[0].mxu0 %v298
        %v1121 = vpop.f32.mrb[0].mxu0
        %v1122 = vadd.f32 %v929, %v1121
        %v1123 = vpop.f32.mrb[0].mxu0
        %v1124 = vadd.f32 %v931, %v1123
        %v1125 = vpop.f32.mrb[0].mxu0
        %v1126 = vadd.f32 %v933, %v1125
        %v1127 = vpop.f32.mrb[0].mxu0
        %v1128 = vadd.f32 %v935, %v1127
        %1129 = vmatprep.mubr.bf16.mxu0 0
        %1130 = vmatmul.mubr.bf16.gmra.mrb[0].mxu0 %v301
        %v1131 = vpop.f32.mrb[0].mxu0
        %v1132 = vadd.f32 %v939, %v1131
        %v1133 = vpop.f32.mrb[0].mxu0
        %v1134 = vadd.f32 %v941, %v1133
        %v1135 = vpop.f32.mrb[0].mxu0
        %v1136 = vadd.f32 %v943, %v1135
        %v1137 = vpop.f32.mrb[0].mxu0
        %v1138 = vadd.f32 %v945, %v1137
        %1139 = vmatprep.mubr.bf16.mxu0 0
        %1140 = vmatmul.mubr.bf16.gmra.mrb[0].mxu0 %v304
        %v1141 = vpop.f32.mrb[0].mxu0
        %v1142 = vadd.f32 %v949, %v1141
        %v1143 = vpop.f32.mrb[0].mxu0
        %v1144 = vadd.f32 %v951, %v1143
        %v1145 = vpop.f32.mrb[0].mxu0
        %v1146 = vadd.f32 %v953, %v1145
        %v1147 = vpop.f32.mrb[0].mxu0
        %v1148 = vadd.f32 %v955, %v1147
        %1149 = vmatprep.mubr.bf16.mxu0 0
        %1150 = vmatmul.mubr.bf16.gmra.mrb[0].mxu0 %v307
        %v1151 = vpop.f32.mrb[0].mxu0
        %v1152 = vadd.f32 %v959, %v1151
        %v1153 = vpop.f32.mrb[0].mxu0
        %v1154 = vadd.f32 %v961, %v1153
        %v1155 = vpop.f32.mrb[0].mxu0
        %v1156 = vadd.f32 %v963, %v1155
        %v1157 = vpop.f32.mrb[0].mxu0
        %v1158 = vadd.f32 %v965, %v1157
        %1159 = vmatprep.mubr.bf16.mxu0 0
        %1160 = vmatmul.mubr.bf16.gmra.mrb[0].mxu0 %v310
        %v1161 = vpop.f32.mrb[0].mxu0
        %v1162 = vadd.f32 %v969, %v1161
        %v1163 = vpop.f32.mrb[0].mxu0
        %v1164 = vadd.f32 %v971, %v1163
        %v1165 = vpop.f32.mrb[0].mxu0
        %v1166 = vadd.f32 %v973, %v1165
        %v1167 = vpop.f32.mrb[0].mxu0
        %v1168 = vadd.f32 %v975, %v1167
        %1169 = vmatprep.mubr.bf16.mxu0 0
        %1170 = vmatmul.mubr.bf16.gmra.mrb[0].mxu0 %v313
        %v1171 = vpop.f32.mrb[0].mxu0
        %v1172 = vadd.f32 %v979, %v1171
        %v1173 = vpop.f32.mrb[0].mxu0
        %v1174 = vadd.f32 %v981, %v1173
        %v1175 = vpop.f32.mrb[0].mxu0
        %v1176 = vadd.f32 %v983, %v1175
        %v1177 = vpop.f32.mrb[0].mxu0
        %v1178 = vadd.f32 %v985, %v1177
        %1179 = vdwg.mxu0
        %1180 = vmatprep.subr.bf16.mxu0 0
        %1181 = vmatpush1.bf16.msra.mxu0 %v652
        %1182 = vmatprep.subr.bf16.mxu0 0
        %1183 = vmatpush1.bf16.msra.mxu0 %v655
        %1184 = vmatprep.subr.bf16.mxu0 0
        %1185 = vmatpush1.bf16.msra.mxu0 %v658
        %1186 = vmatprep.subr.bf16.mxu0 0
        %1187 = vmatpush1.bf16.msra.mxu0 %v661
        %1188 = vmatprep.subr.bf16.mxu0 0
        %1189 = vmatpush1.bf16.msra.mxu0 %v664
        %1190 = vmatprep.subr.bf16.mxu0 0
        %1191 = vmatpush1.bf16.msra.mxu0 %v667
        %1192 = vmatprep.subr.bf16.mxu0 0
        %1193 = vmatpush1.bf16.msra.mxu0 %v670
        %1194 = vmatprep.subr.bf16.mxu0 0
        %1195 = vmatpush1.bf16.msra.mxu0 %v673
        %1196 = vmatprep.subr.bf16.mxu0 0
        %1197 = vmatpush1.bf16.msra.mxu0 %v676
        %1198 = vmatprep.subr.bf16.mxu0 0
        %1199 = vmatpush1.bf16.msra.mxu0 %v679
        %1200 = vmatprep.subr.bf16.mxu0 0
        %1201 = vmatpush1.bf16.msra.mxu0 %v682
        %1202 = vmatprep.subr.bf16.mxu0 0
        %1203 = vmatpush1.bf16.msra.mxu0 %v685
        %1204 = vmatprep.subr.bf16.mxu0 0
        %1205 = vmatpush1.bf16.msra.mxu0 %v688
        %1206 = vmatprep.subr.bf16.mxu0 0
        %1207 = vmatpush1.bf16.msra.mxu0 %v691
        %1208 = vmatprep.subr.bf16.mxu0 0
        %1209 = vmatpush1.bf16.msra.mxu0 %v694
        %1210 = vmatprep.subr.bf16.mxu0 0
        %1211 = vmatpush1.bf16.msra.mxu0 %v697
        %1212 = vmatprep.mubr.bf16.mxu0 %v267
        %1213 = vmatmul.mubr.bf16.gmra.mrb[0].mxu0 %v266
        %v1214 = vpop.f32.mrb[0].mxu0
        %v1215 = vadd.f32 0.0, %v1214
        %v1216 = vpop.f32.mrb[0].mxu0
        %v1217 = vpop.f32.mrb[0].mxu0
        %v1218 = vadd.f32 0.0, %v1217
        %v1219 = vpop.f32.mrb[0].mxu0
        %1220 = vmatprep.mubr.bf16.mxu0 %v270
        %1221 = vmatmul.mubr.bf16.gmra.mrb[0].mxu0 %v269
        %v1222 = vpop.f32.mrb[0].mxu0
        %v1223 = vadd.f32 0.0, %v1222
        %v1224 = vpop.f32.mrb[0].mxu0
        %v1225 = vpop.f32.mrb[0].mxu0
        %v1226 = vadd.f32 0.0, %v1225
        %v1227 = vpop.f32.mrb[0].mxu0
        %1228 = vmatprep.mubr.bf16.mxu0 %v273
        %1229 = vmatmul.mubr.bf16.gmra.mrb[0].mxu0 %v272
        %v1230 = vpop.f32.mrb[0].mxu0
        %v1231 = vadd.f32 0.0, %v1230
        %v1232 = vpop.f32.mrb[0].mxu0
        %v1233 = vpop.f32.mrb[0].mxu0
        %v1234 = vadd.f32 0.0, %v1233
        %v1235 = vpop.f32.mrb[0].mxu0
        %1236 = vmatprep.mubr.bf16.mxu0 %v276
        %1237 = vmatmul.mubr.bf16.gmra.mrb[0].mxu0 %v275
        %v1238 = vpop.f32.mrb[0].mxu0
        %v1239 = vadd.f32 0.0, %v1238
        %v1240 = vpop.f32.mrb[0].mxu0
        %v1241 = vpop.f32.mrb[0].mxu0
        %v1242 = vadd.f32 0.0, %v1241
        %v1243 = vpop.f32.mrb[0].mxu0
        %1244 = vmatprep.mubr.bf16.mxu0 %v279
        %1245 = vmatmul.mubr.bf16.gmra.mrb[0].mxu0 %v278
        %v1246 = vpop.f32.mrb[0].mxu0
        %v1247 = vadd.f32 0.0, %v1246
        %v1248 = vpop.f32.mrb[0].mxu0
        %v1249 = vpop.f32.mrb[0].mxu0
        %v1250 = vadd.f32 0.0, %v1249
        %v1251 = vpop.f32.mrb[0].mxu0
        %1252 = vmatprep.mubr.bf16.mxu0 %v282
        %1253 = vmatmul.mubr.bf16.gmra.mrb[0].mxu0 %v281
        %v1254 = vpop.f32.mrb[0].mxu0
        %v1255 = vadd.f32 0.0, %v1254
        %v1256 = vpop.f32.mrb[0].mxu0
        %v1257 = vpop.f32.mrb[0].mxu0
        %v1258 = vadd.f32 0.0, %v1257
        %v1259 = vpop.f32.mrb[0].mxu0
        %1260 = vmatprep.mubr.bf16.mxu0 %v285
        %1261 = vmatmul.mubr.bf16.gmra.mrb[0].mxu0 %v284
        %v1262 = vpop.f32.mrb[0].mxu0
        %v1263 = vadd.f32 0.0, %v1262
        %v1264 = vpop.f32.mrb[0].mxu0
        %v1265 = vpop.f32.mrb[0].mxu0
        %v1266 = vadd.f32 0.0, %v1265
        %v1267 = vpop.f32.mrb[0].mxu0
        %1268 = vmatprep.mubr.bf16.mxu0 %v288
        %1269 = vmatmul.mubr.bf16.gmra.mrb[0].mxu0 %v287
        %v1270 = vpop.f32.mrb[0].mxu0
        %v1271 = vadd.f32 0.0, %v1270
        %v1272 = vpop.f32.mrb[0].mxu0
        %v1273 = vpop.f32.mrb[0].mxu0
        %v1274 = vadd.f32 0.0, %v1273
        %v1275 = vpop.f32.mrb[0].mxu0
        %1276 = vmatprep.mubr.bf16.mxu0 %v291
        %1277 = vmatmul.mubr.bf16.gmra.mrb[0].mxu0 %v290
        %v1278 = vpop.f32.mrb[0].mxu0
        %v1279 = vadd.f32 0.0, %v1278
        %v1280 = vpop.f32.mrb[0].mxu0
        %v1281 = vpop.f32.mrb[0].mxu0
        %v1282 = vadd.f32 0.0, %v1281
        %v1283 = vpop.f32.mrb[0].mxu0
        %1284 = vmatprep.mubr.bf16.mxu0 %v294
        %1285 = vmatmul.mubr.bf16.gmra.mrb[0].mxu0 %v293
        %v1286 = vpop.f32.mrb[0].mxu0
        %v1287 = vadd.f32 0.0, %v1286
        %v1288 = vpop.f32.mrb[0].mxu0
        %v1289 = vpop.f32.mrb[0].mxu0
        %v1290 = vadd.f32 0.0, %v1289
        %v1291 = vpop.f32.mrb[0].mxu0
        %1292 = vmatprep.mubr.bf16.mxu0 %v297
        %1293 = vmatmul.mubr.bf16.gmra.mrb[0].mxu0 %v296
        %v1294 = vpop.f32.mrb[0].mxu0
        %v1295 = vadd.f32 0.0, %v1294
        %v1296 = vpop.f32.mrb[0].mxu0
        %v1297 = vpop.f32.mrb[0].mxu0
        %v1298 = vadd.f32 0.0, %v1297
        %v1299 = vpop.f32.mrb[0].mxu0
        %1300 = vmatprep.mubr.bf16.mxu0 %v300
        %1301 = vmatmul.mubr.bf16.gmra.mrb[0].mxu0 %v299
        %v1302 = vpop.f32.mrb[0].mxu0
        %v1303 = vadd.f32 0.0, %v1302
        %v1304 = vpop.f32.mrb[0].mxu0
        %v1305 = vpop.f32.mrb[0].mxu0
        %v1306 = vadd.f32 0.0, %v1305
        %v1307 = vpop.f32.mrb[0].mxu0
        %1308 = vmatprep.mubr.bf16.mxu0 %v303
        %1309 = vmatmul.mubr.bf16.gmra.mrb[0].mxu0 %v302
        %v1310 = vpop.f32.mrb[0].mxu0
        %v1311 = vadd.f32 0.0, %v1310
        %v1312 = vpop.f32.mrb[0].mxu0
        %v1313 = vpop.f32.mrb[0].mxu0
        %v1314 = vadd.f32 0.0, %v1313
        %v1315 = vpop.f32.mrb[0].mxu0
        %1316 = vmatprep.mubr.bf16.mxu0 %v306
        %1317 = vmatmul.mubr.bf16.gmra.mrb[0].mxu0 %v305
        %v1318 = vpop.f32.mrb[0].mxu0
        %v1319 = vadd.f32 0.0, %v1318
        %v1320 = vpop.f32.mrb[0].mxu0
        %v1321 = vpop.f32.mrb[0].mxu0
        %v1322 = vadd.f32 0.0, %v1321
        %v1323 = vpop.f32.mrb[0].mxu0
        %1324 = vmatprep.mubr.bf16.mxu0 %v309
        %1325 = vmatmul.mubr.bf16.gmra.mrb[0].mxu0 %v308
        %v1326 = vpop.f32.mrb[0].mxu0
        %v1327 = vadd.f32 0.0, %v1326
        %v1328 = vpop.f32.mrb[0].mxu0
        %v1329 = vpop.f32.mrb[0].mxu0
        %v1330 = vadd.f32 0.0, %v1329
        %v1331 = vpop.f32.mrb[0].mxu0
        %1332 = vmatprep.mubr.bf16.mxu0 %v312
        %1333 = vmatmul.mubr.bf16.gmra.mrb[0].mxu0 %v311
        %v1334 = vpop.f32.mrb[0].mxu0
        %v1335 = vadd.f32 0.0, %v1334
        %v1336 = vpop.f32.mrb[0].mxu0
        %v1337 = vpop.f32.mrb[0].mxu0
        %v1338 = vadd.f32 0.0, %v1337
        %v1339 = vpop.f32.mrb[0].mxu0
        %1340 = vdwg.mxu0
        %1341 = vmatprep.subr.bf16.mxu0 0
        %1342 = vmatpush1.bf16.msra.mxu0 %v700
        %1343 = vmatprep.subr.bf16.mxu0 0
        %1344 = vmatpush1.bf16.msra.mxu0 %v703
        %1345 = vmatprep.subr.bf16.mxu0 0
        %1346 = vmatpush1.bf16.msra.mxu0 %v706
        %1347 = vmatprep.subr.bf16.mxu0 0
        %1348 = vmatpush1.bf16.msra.mxu0 %v709
        %1349 = vmatprep.subr.bf16.mxu0 0
        %1350 = vmatpush1.bf16.msra.mxu0 %v712
        %1351 = vmatprep.subr.bf16.mxu0 0
        %1352 = vmatpush1.bf16.msra.mxu0 %v715
        %1353 = vmatprep.subr.bf16.mxu0 0
        %1354 = vmatpush1.bf16.msra.mxu0 %v718
        %1355 = vmatprep.subr.bf16.mxu0 0
        %1356 = vmatpush1.bf16.msra.mxu0 %v721
        %1357 = vmatprep.subr.bf16.mxu0 0
        %1358 = vmatpush1.bf16.msra.mxu0 0
        %1359 = vmatprep.subr.bf16.mxu0 0
        %1360 = vmatpush1.bf16.msra.mxu0 0
        %1361 = vmatprep.subr.bf16.mxu0 0
        %1362 = vmatpush1.bf16.msra.mxu0 0
        %1363 = vmatprep.subr.bf16.mxu0 0
        %1364 = vmatpush1.bf16.msra.mxu0 0
        %1365 = vmatprep.subr.bf16.mxu0 0
        %1366 = vmatpush1.bf16.msra.mxu0 0
        %1367 = vmatprep.subr.bf16.mxu0 0
        %1368 = vmatpush1.bf16.msra.mxu0 0
        %1369 = vmatprep.subr.bf16.mxu0 0
        %1370 = vmatpush1.bf16.msra.mxu0 0
        %1371 = vmatprep.subr.bf16.mxu0 0
        %1372 = vmatpush1.bf16.msra.mxu0 0
        %1373 = vmatprep.mubr.bf16.mxu0 0
        %1374 = vmatmul.mubr.bf16.gmra.mrb[0].mxu0 %v268
        %v1375 = vpop.f32.mrb[0].mxu0
        %v1376 = vadd.f32 %v1215, %v1375
        %v1377 = vpop.f32.mrb[0].mxu0
        %v1378 = vpop.f32.mrb[0].mxu0
        %v1379 = vadd.f32 %v1218, %v1378
        %v1380 = vpop.f32.mrb[0].mxu0
        %1381 = vmatprep.mubr.bf16.mxu0 0
        %1382 = vmatmul.mubr.bf16.gmra.mrb[0].mxu0 %v271
        %v1383 = vpop.f32.mrb[0].mxu0
        %v1384 = vadd.f32 %v1223, %v1383
        %v1385 = vpop.f32.mrb[0].mxu0
        %v1386 = vpop.f32.mrb[0].mxu0
        %v1387 = vadd.f32 %v1226, %v1386
        %v1388 = vpop.f32.mrb[0].mxu0
        %1389 = vmatprep.mubr.bf16.mxu0 0
        %1390 = vmatmul.mubr.bf16.gmra.mrb[0].mxu0 %v274
        %v1391 = vpop.f32.mrb[0].mxu0
        %v1392 = vadd.f32 %v1231, %v1391
        %v1393 = vpop.f32.mrb[0].mxu0
        %v1394 = vpop.f32.mrb[0].mxu0
        %v1395 = vadd.f32 %v1234, %v1394
        %v1396 = vpop.f32.mrb[0].mxu0
        %1397 = vmatprep.mubr.bf16.mxu0 0
        %1398 = vmatmul.mubr.bf16.gmra.mrb[0].mxu0 %v277
        %v1399 = vpop.f32.mrb[0].mxu0
        %v1400 = vadd.f32 %v1239, %v1399
        %v1401 = vpop.f32.mrb[0].mxu0
        %v1402 = vpop.f32.mrb[0].mxu0
        %v1403 = vadd.f32 %v1242, %v1402
        %v1404 = vpop.f32.mrb[0].mxu0
        %1405 = vmatprep.mubr.bf16.mxu0 0
        %1406 = vmatmul.mubr.bf16.gmra.mrb[0].mxu0 %v280
        %v1407 = vpop.f32.mrb[0].mxu0
        %v1408 = vadd.f32 %v1247, %v1407
        %v1409 = vpop.f32.mrb[0].mxu0
        %v1410 = vpop.f32.mrb[0].mxu0
        %v1411 = vadd.f32 %v1250, %v1410
        %v1412 = vpop.f32.mrb[0].mxu0
        %1413 = vmatprep.mubr.bf16.mxu0 0
        %1414 = vmatmul.mubr.bf16.gmra.mrb[0].mxu0 %v283
        %v1415 = vpop.f32.mrb[0].mxu0
        %v1416 = vadd.f32 %v1255, %v1415
        %v1417 = vpop.f32.mrb[0].mxu0
        %v1418 = vpop.f32.mrb[0].mxu0
        %v1419 = vadd.f32 %v1258, %v1418
        %v1420 = vpop.f32.mrb[0].mxu0
        %1421 = vmatprep.mubr.bf16.mxu0 0
        %1422 = vmatmul.mubr.bf16.gmra.mrb[0].mxu0 %v286
        %v1423 = vpop.f32.mrb[0].mxu0
        %v1424 = vadd.f32 %v1263, %v1423
        %v1425 = vpop.f32.mrb[0].mxu0
        %v1426 = vpop.f32.mrb[0].mxu0
        %v1427 = vadd.f32 %v1266, %v1426
        %v1428 = vpop.f32.mrb[0].mxu0
        %1429 = vmatprep.mubr.bf16.mxu0 0
        %1430 = vmatmul.mubr.bf16.gmra.mrb[0].mxu0 %v289
        %v1431 = vpop.f32.mrb[0].mxu0
        %v1432 = vadd.f32 %v1271, %v1431
        %v1433 = vpop.f32.mrb[0].mxu0
        %v1434 = vpop.f32.mrb[0].mxu0
        %v1435 = vadd.f32 %v1274, %v1434
        %v1436 = vpop.f32.mrb[0].mxu0
        %1437 = vmatprep.mubr.bf16.mxu0 0
        %1438 = vmatmul.mubr.bf16.gmra.mrb[0].mxu0 %v292
        %v1439 = vpop.f32.mrb[0].mxu0
        %v1440 = vadd.f32 %v1279, %v1439
        %v1441 = vpop.f32.mrb[0].mxu0
        %v1442 = vpop.f32.mrb[0].mxu0
        %v1443 = vadd.f32 %v1282, %v1442
        %v1444 = vpop.f32.mrb[0].mxu0
        %1445 = vmatprep.mubr.bf16.mxu0 0
        %1446 = vmatmul.mubr.bf16.gmra.mrb[0].mxu0 %v295
        %v1447 = vpop.f32.mrb[0].mxu0
        %v1448 = vadd.f32 %v1287, %v1447
        %v1449 = vpop.f32.mrb[0].mxu0
        %v1450 = vpop.f32.mrb[0].mxu0
        %v1451 = vadd.f32 %v1290, %v1450
        %v1452 = vpop.f32.mrb[0].mxu0
        %1453 = vmatprep.mubr.bf16.mxu0 0
        %1454 = vmatmul.mubr.bf16.gmra.mrb[0].mxu0 %v298
        %v1455 = vpop.f32.mrb[0].mxu0
        %v1456 = vadd.f32 %v1295, %v1455
        %v1457 = vpop.f32.mrb[0].mxu0
        %v1458 = vpop.f32.mrb[0].mxu0
        %v1459 = vadd.f32 %v1298, %v1458
        %v1460 = vpop.f32.mrb[0].mxu0
        %1461 = vmatprep.mubr.bf16.mxu0 0
        %1462 = vmatmul.mubr.bf16.gmra.mrb[0].mxu0 %v301
        %v1463 = vpop.f32.mrb[0].mxu0
        %v1464 = vadd.f32 %v1303, %v1463
        %v1465 = vpop.f32.mrb[0].mxu0
        %v1466 = vpop.f32.mrb[0].mxu0
        %v1467 = vadd.f32 %v1306, %v1466
        %v1468 = vpop.f32.mrb[0].mxu0
        %1469 = vmatprep.mubr.bf16.mxu0 0
        %1470 = vmatmul.mubr.bf16.gmra.mrb[0].mxu0 %v304
        %v1471 = vpop.f32.mrb[0].mxu0
        %v1472 = vadd.f32 %v1311, %v1471
        %v1473 = vpop.f32.mrb[0].mxu0
        %v1474 = vpop.f32.mrb[0].mxu0
        %v1475 = vadd.f32 %v1314, %v1474
        %v1476 = vpop.f32.mrb[0].mxu0
        %1477 = vmatprep.mubr.bf16.mxu0 0
        %1478 = vmatmul.mubr.bf16.gmra.mrb[0].mxu0 %v307
        %v1479 = vpop.f32.mrb[0].mxu0
        %v1480 = vadd.f32 %v1319, %v1479
        %v1481 = vpop.f32.mrb[0].mxu0
        %v1482 = vpop.f32.mrb[0].mxu0
        %v1483 = vadd.f32 %v1322, %v1482
        %v1484 = vpop.f32.mrb[0].mxu0
        %1485 = vmatprep.mubr.bf16.mxu0 0
        %1486 = vmatmul.mubr.bf16.gmra.mrb[0].mxu0 %v310
        %v1487 = vpop.f32.mrb[0].mxu0
        %v1488 = vadd.f32 %v1327, %v1487
        %v1489 = vpop.f32.mrb[0].mxu0
        %v1490 = vpop.f32.mrb[0].mxu0
        %v1491 = vadd.f32 %v1330, %v1490
        %v1492 = vpop.f32.mrb[0].mxu0
        %1493 = vmatprep.mubr.bf16.mxu0 0
        %1494 = vmatmul.mubr.bf16.gmra.mrb[0].mxu0 %v313
        %v1495 = vpop.f32.mrb[0].mxu0
        %v1496 = vadd.f32 %v1335, %v1495
        %v1497 = vpop.f32.mrb[0].mxu0
        %v1498 = vpop.f32.mrb[0].mxu0
        %v1499 = vadd.f32 %v1338, %v1498
        %v1500 = vpop.f32.mrb[0].mxu0
        %1501 = vdwg.mxu0
        %v1502 = vpack.c.bf16 %v1026, %v1022
        %v1503 = vpack.c.bf16 %v1036, %v1032
        %v1504 = vpack.c.bf16 %v1046, %v1042
        %v1505 = vpack.c.bf16 %v1056, %v1052
        %v1506 = vpack.c.bf16 %v1066, %v1062
        %v1507 = vpack.c.bf16 %v1076, %v1072
        %v1508 = vpack.c.bf16 %v1086, %v1082
        %v1509 = vpack.c.bf16 %v1096, %v1092
        %v1510 = vpack.c.bf16 %v1106, %v1102
        %v1511 = vpack.c.bf16 %v1116, %v1112
        %v1512 = vpack.c.bf16 %v1126, %v1122
        %v1513 = vpack.c.bf16 %v1136, %v1132
        %v1514 = vpack.c.bf16 %v1146, %v1142
        %v1515 = vpack.c.bf16 %v1156, %v1152
        %v1516 = vpack.c.bf16 %v1166, %v1162
        %v1517 = vpack.c.bf16 %v1176, %v1172
        %v1518 = vpack.c.bf16 %v1028, %v1024
        %v1519 = vpack.c.bf16 %v1038, %v1034
        %v1520 = vpack.c.bf16 %v1048, %v1044
        %v1521 = vpack.c.bf16 %v1058, %v1054
        %v1522 = vpack.c.bf16 %v1068, %v1064
        %v1523 = vpack.c.bf16 %v1078, %v1074
        %v1524 = vpack.c.bf16 %v1088, %v1084
        %v1525 = vpack.c.bf16 %v1098, %v1094
        %v1526 = vpack.c.bf16 %v1108, %v1104
        %v1527 = vpack.c.bf16 %v1118, %v1114
        %v1528 = vpack.c.bf16 %v1128, %v1124
        %v1529 = vpack.c.bf16 %v1138, %v1134
        %v1530 = vpack.c.bf16 %v1148, %v1144
        %v1531 = vpack.c.bf16 %v1158, %v1154
        %v1532 = vpack.c.bf16 %v1168, %v1164
        %v1533 = vpack.c.bf16 %v1178, %v1174
        %v1534 = vpack.c.bf16 %v1379, %v1376
        %v1535 = vpack.c.bf16 %v1387, %v1384
        %v1536 = vpack.c.bf16 %v1395, %v1392
        %v1537 = vpack.c.bf16 %v1403, %v1400
        %v1538 = vpack.c.bf16 %v1411, %v1408
        %v1539 = vpack.c.bf16 %v1419, %v1416
        %v1540 = vpack.c.bf16 %v1427, %v1424
        %v1541 = vpack.c.bf16 %v1435, %v1432
        %v1542 = vpack.c.bf16 %v1443, %v1440
        %v1543 = vpack.c.bf16 %v1451, %v1448
        %v1544 = vpack.c.bf16 %v1459, %v1456
        %v1545 = vpack.c.bf16 %v1467, %v1464
        %v1546 = vpack.c.bf16 %v1475, %v1472
        %v1547 = vpack.c.bf16 %v1483, %v1480
        %v1548 = vpack.c.bf16 %v1491, %v1488
        %v1549 = vpack.c.bf16 %v1499, %v1496
        %1550 = vmatprep.subr.bf16.mxu0 0
        %1551 = vmatpush1.bf16.xpose.msra.mxu0 %v1518
        %1552 = vmatprep.subr.bf16.mxu0 0
        %1553 = vmatpush1.bf16.xpose.msra.mxu0 %v1519
        %1554 = vmatprep.subr.bf16.mxu0 0
        %1555 = vmatpush1.bf16.xpose.msra.mxu0 %v1520
        %1556 = vmatprep.subr.bf16.mxu0 0
        %1557 = vmatpush1.bf16.xpose.msra.mxu0 %v1521
        %1558 = vmatprep.subr.bf16.mxu0 0
        %1559 = vmatpush1.bf16.xpose.msra.mxu0 %v1522
        %1560 = vmatprep.subr.bf16.mxu0 0
        %1561 = vmatpush1.bf16.xpose.msra.mxu0 %v1523
        %1562 = vmatprep.subr.bf16.mxu0 0
        %1563 = vmatpush1.bf16.xpose.msra.mxu0 %v1524
        %1564 = vmatprep.subr.bf16.mxu0 0
        %1565 = vmatpush1.bf16.xpose.msra.mxu0 %v1525
        %1566 = vmatprep.subr.bf16.mxu0 0
        %1567 = vmatpush1.bf16.xpose.msra.mxu0 0
        %1568 = vmatprep.subr.bf16.mxu0 0
        %1569 = vmatpush1.bf16.xpose.msra.mxu0 0
        %1570 = vmatprep.subr.bf16.mxu0 0
        %1571 = vmatpush1.bf16.xpose.msra.mxu0 0
        %1572 = vmatprep.subr.bf16.mxu0 0
        %1573 = vmatpush1.bf16.xpose.msra.mxu0 0
        %1574 = vmatprep.subr.bf16.mxu0 0
        %1575 = vmatpush1.bf16.xpose.msra.mxu0 0
        %1576 = vmatprep.subr.bf16.mxu0 0
        %1577 = vmatpush1.bf16.xpose.msra.mxu0 0
        %1578 = vmatprep.subr.bf16.mxu0 0
        %1579 = vmatpush1.bf16.xpose.msra.mxu0 0
        %1580 = vmatprep.subr.bf16.mxu0 0
        %1581 = vmatpush1.bf16.xpose.msra.mxu0 0
        %1582 = vmatprep.mubr.bf16.mxu0 0
        %1583 = vmatmul.mubr.bf16.gmra.mrb[0].mxu0 %v1502
        %v1584 = vpop.f32.mrb[0].mxu0
        %v1585 = vadd.f32 0.0, %v1584
        %v1586 = vpop.f32.mrb[0].mxu0
        %v1587 = vpop.f32.mrb[0].mxu0
        %v1588 = vadd.f32 0.0, %v1587
        %v1589 = vpop.f32.mrb[0].mxu0
        %1590 = vmatprep.mubr.bf16.mxu0 0
        %1591 = vmatmul.mubr.bf16.gmra.mrb[0].mxu0 %v1503
        %v1592 = vpop.f32.mrb[0].mxu0
        %v1593 = vadd.f32 0.0, %v1592
        %v1594 = vpop.f32.mrb[0].mxu0
        %v1595 = vpop.f32.mrb[0].mxu0
        %v1596 = vadd.f32 0.0, %v1595
        %v1597 = vpop.f32.mrb[0].mxu0
        %1598 = vmatprep.mubr.bf16.mxu0 0
        %1599 = vmatmul.mubr.bf16.gmra.mrb[0].mxu0 %v1504
        %v1600 = vpop.f32.mrb[0].mxu0
        %v1601 = vadd.f32 0.0, %v1600
        %v1602 = vpop.f32.mrb[0].mxu0
        %v1603 = vpop.f32.mrb[0].mxu0
        %v1604 = vadd.f32 0.0, %v1603
        %v1605 = vpop.f32.mrb[0].mxu0
        %1606 = vmatprep.mubr.bf16.mxu0 0
        %1607 = vmatmul.mubr.bf16.gmra.mrb[0].mxu0 %v1505
        %v1608 = vpop.f32.mrb[0].mxu0
        %v1609 = vadd.f32 0.0, %v1608
        %v1610 = vpop.f32.mrb[0].mxu0
        %v1611 = vpop.f32.mrb[0].mxu0
        %v1612 = vadd.f32 0.0, %v1611
        %v1613 = vpop.f32.mrb[0].mxu0
        %1614 = vmatprep.mubr.bf16.mxu0 0
        %1615 = vmatmul.mubr.bf16.gmra.mrb[0].mxu0 %v1506
        %v1616 = vpop.f32.mrb[0].mxu0
        %v1617 = vadd.f32 0.0, %v1616
        %v1618 = vpop.f32.mrb[0].mxu0
        %v1619 = vpop.f32.mrb[0].mxu0
        %v1620 = vadd.f32 0.0, %v1619
        %v1621 = vpop.f32.mrb[0].mxu0
        %1622 = vmatprep.mubr.bf16.mxu0 0
        %1623 = vmatmul.mubr.bf16.gmra.mrb[0].mxu0 %v1507
        %v1624 = vpop.f32.mrb[0].mxu0
        %v1625 = vadd.f32 0.0, %v1624
        %v1626 = vpop.f32.mrb[0].mxu0
        %v1627 = vpop.f32.mrb[0].mxu0
        %v1628 = vadd.f32 0.0, %v1627
        %v1629 = vpop.f32.mrb[0].mxu0
        %1630 = vmatprep.mubr.bf16.mxu0 0
        %1631 = vmatmul.mubr.bf16.gmra.mrb[0].mxu0 %v1508
        %v1632 = vpop.f32.mrb[0].mxu0
        %v1633 = vadd.f32 0.0, %v1632
        %v1634 = vpop.f32.mrb[0].mxu0
        %v1635 = vpop.f32.mrb[0].mxu0
        %v1636 = vadd.f32 0.0, %v1635
        %v1637 = vpop.f32.mrb[0].mxu0
        %1638 = vmatprep.mubr.bf16.mxu0 0
        %1639 = vmatmul.mubr.bf16.gmra.mrb[0].mxu0 %v1509
        %v1640 = vpop.f32.mrb[0].mxu0
        %v1641 = vadd.f32 0.0, %v1640
        %v1642 = vpop.f32.mrb[0].mxu0
        %v1643 = vpop.f32.mrb[0].mxu0
        %v1644 = vadd.f32 0.0, %v1643
        %v1645 = vpop.f32.mrb[0].mxu0
        %1646 = vdwg.mxu0
        %1647 = vmatprep.subr.bf16.mxu0 0
        %1648 = vmatpush1.bf16.xpose.msra.mxu0 %v1526
        %1649 = vmatprep.subr.bf16.mxu0 0
        %1650 = vmatpush1.bf16.xpose.msra.mxu0 %v1527
        %1651 = vmatprep.subr.bf16.mxu0 0
        %1652 = vmatpush1.bf16.xpose.msra.mxu0 %v1528
        %1653 = vmatprep.subr.bf16.mxu0 0
        %1654 = vmatpush1.bf16.xpose.msra.mxu0 %v1529
        %1655 = vmatprep.subr.bf16.mxu0 0
        %1656 = vmatpush1.bf16.xpose.msra.mxu0 %v1530
        %1657 = vmatprep.subr.bf16.mxu0 0
        %1658 = vmatpush1.bf16.xpose.msra.mxu0 %v1531
        %1659 = vmatprep.subr.bf16.mxu0 0
        %1660 = vmatpush1.bf16.xpose.msra.mxu0 %v1532
        %1661 = vmatprep.subr.bf16.mxu0 0
        %1662 = vmatpush1.bf16.xpose.msra.mxu0 %v1533
        %1663 = vmatprep.subr.bf16.mxu0 0
        %1664 = vmatpush1.bf16.xpose.msra.mxu0 0
        %1665 = vmatprep.subr.bf16.mxu0 0
        %1666 = vmatpush1.bf16.xpose.msra.mxu0 0
        %1667 = vmatprep.subr.bf16.mxu0 0
        %1668 = vmatpush1.bf16.xpose.msra.mxu0 0
        %1669 = vmatprep.subr.bf16.mxu0 0
        %1670 = vmatpush1.bf16.xpose.msra.mxu0 0
        %1671 = vmatprep.subr.bf16.mxu0 0
        %1672 = vmatpush1.bf16.xpose.msra.mxu0 0
        %1673 = vmatprep.subr.bf16.mxu0 0
        %1674 = vmatpush1.bf16.xpose.msra.mxu0 0
        %1675 = vmatprep.subr.bf16.mxu0 0
        %1676 = vmatpush1.bf16.xpose.msra.mxu0 0
        %1677 = vmatprep.subr.bf16.mxu0 0
        %1678 = vmatpush1.bf16.xpose.msra.mxu0 0
        %1679 = vmatprep.mubr.bf16.mxu0 0
        %1680 = vmatmul.mubr.bf16.gmra.mrb[0].mxu0 %v1510
        %v1681 = vpop.f32.mrb[0].mxu0
        %v1682 = vadd.f32 0.0, %v1681
        %v1683 = vpop.f32.mrb[0].mxu0
        %v1684 = vpop.f32.mrb[0].mxu0
        %v1685 = vadd.f32 0.0, %v1684
        %v1686 = vpop.f32.mrb[0].mxu0
        %1687 = vmatprep.mubr.bf16.mxu0 0
        %1688 = vmatmul.mubr.bf16.gmra.mrb[0].mxu0 %v1511
        %v1689 = vpop.f32.mrb[0].mxu0
        %v1690 = vadd.f32 0.0, %v1689
        %v1691 = vpop.f32.mrb[0].mxu0
        %v1692 = vpop.f32.mrb[0].mxu0
        %v1693 = vadd.f32 0.0, %v1692
        %v1694 = vpop.f32.mrb[0].mxu0
        %1695 = vmatprep.mubr.bf16.mxu0 0
        %1696 = vmatmul.mubr.bf16.gmra.mrb[0].mxu0 %v1512
        %v1697 = vpop.f32.mrb[0].mxu0
        %v1698 = vadd.f32 0.0, %v1697
        %v1699 = vpop.f32.mrb[0].mxu0
        %v1700 = vpop.f32.mrb[0].mxu0
        %v1701 = vadd.f32 0.0, %v1700
        %v1702 = vpop.f32.mrb[0].mxu0
        %1703 = vmatprep.mubr.bf16.mxu0 0
        %1704 = vmatmul.mubr.bf16.gmra.mrb[0].mxu0 %v1513
        %v1705 = vpop.f32.mrb[0].mxu0
        %v1706 = vadd.f32 0.0, %v1705
        %v1707 = vpop.f32.mrb[0].mxu0
        %v1708 = vpop.f32.mrb[0].mxu0
        %v1709 = vadd.f32 0.0, %v1708
        %v1710 = vpop.f32.mrb[0].mxu0
        %1711 = vmatprep.mubr.bf16.mxu0 0
        %1712 = vmatmul.mubr.bf16.gmra.mrb[0].mxu0 %v1514
        %v1713 = vpop.f32.mrb[0].mxu0
        %v1714 = vadd.f32 0.0, %v1713
        %v1715 = vpop.f32.mrb[0].mxu0
        %v1716 = vpop.f32.mrb[0].mxu0
        %v1717 = vadd.f32 0.0, %v1716
        %v1718 = vpop.f32.mrb[0].mxu0
        %1719 = vmatprep.mubr.bf16.mxu0 0
        %1720 = vmatmul.mubr.bf16.gmra.mrb[0].mxu0 %v1515
        %v1721 = vpop.f32.mrb[0].mxu0
        %v1722 = vadd.f32 0.0, %v1721
        %v1723 = vpop.f32.mrb[0].mxu0
        %v1724 = vpop.f32.mrb[0].mxu0
        %v1725 = vadd.f32 0.0, %v1724
        %v1726 = vpop.f32.mrb[0].mxu0
        %1727 = vmatprep.mubr.bf16.mxu0 0
        %1728 = vmatmul.mubr.bf16.gmra.mrb[0].mxu0 %v1516
        %v1729 = vpop.f32.mrb[0].mxu0
        %v1730 = vadd.f32 0.0, %v1729
        %v1731 = vpop.f32.mrb[0].mxu0
        %v1732 = vpop.f32.mrb[0].mxu0
        %v1733 = vadd.f32 0.0, %v1732
        %v1734 = vpop.f32.mrb[0].mxu0
        %1735 = vmatprep.mubr.bf16.mxu0 0
        %1736 = vmatmul.mubr.bf16.gmra.mrb[0].mxu0 %v1517
        %v1737 = vpop.f32.mrb[0].mxu0
        %v1738 = vadd.f32 0.0, %v1737
        %v1739 = vpop.f32.mrb[0].mxu0
        %v1740 = vpop.f32.mrb[0].mxu0
        %v1741 = vadd.f32 0.0, %v1740
        %v1742 = vpop.f32.mrb[0].mxu0
        %1743 = vdwg.mxu0
        %v1744 = vlaneseq
        %v1745 = vshrl.u32 %v1744, 7
        %v1746 = vadd.s32 %v1745, 8
        %v1747 = vadd.s32 %v1745, 16
        %v1748 = vadd.s32 %v1745, 24
        %v1749 = vadd.s32 %v1745, 32
        %v1750 = vadd.s32 %v1745, 40
        %v1751 = vadd.s32 %v1745, 48
        %v1752 = vadd.s32 %v1745, 56
        %v1753 = vadd.s32 %v1745, 64
        %v1754 = vadd.s32 %v1745, 72
        %v1755 = vadd.s32 %v1745, 80
        %v1756 = vadd.s32 %v1745, 88
        %v1757 = vadd.s32 %v1745, 96
        %v1758 = vadd.s32 %v1745, 104
        %v1759 = vadd.s32 %v1745, 112
        %v1760 = vadd.s32 %v1745, 120
        %v1761 = vlaneseq
        %v1762 = vand.u32 %v1761, 127
        %vm1763 = vcmp.le.s32.totalorder %v1762, %v1745
        %vm1764 = vcmp.le.s32.totalorder %v1762, %v1746
        %vm1765 = vcmp.le.s32.totalorder %v1762, %v1747
        %vm1766 = vcmp.le.s32.totalorder %v1762, %v1748
        %vm1767 = vcmp.le.s32.totalorder %v1762, %v1749
        %vm1768 = vcmp.le.s32.totalorder %v1762, %v1750
        %vm1769 = vcmp.le.s32.totalorder %v1762, %v1751
        %vm1770 = vcmp.le.s32.totalorder %v1762, %v1752
        %vm1771 = vcmp.le.s32.totalorder %v1762, %v1753
        %vm1772 = vcmp.le.s32.totalorder %v1762, %v1754
        %vm1773 = vcmp.le.s32.totalorder %v1762, %v1755
        %vm1774 = vcmp.le.s32.totalorder %v1762, %v1756
        %vm1775 = vcmp.le.s32.totalorder %v1762, %v1757
        %vm1776 = vcmp.le.s32.totalorder %v1762, %v1758
        %vm1777 = vcmp.le.s32.totalorder %v1762, %v1759
        %vm1778 = vcmp.le.s32.totalorder %v1762, %v1760
        %v1779 = vsel %vm1763, %v1585, -inf
        %v1780 = vsel %vm1764, %v1588, -inf
        %v1781 = vsel %vm1765, %v1593, -inf
        %v1782 = vsel %vm1766, %v1596, -inf
        %v1783 = vsel %vm1767, %v1601, -inf
        %v1784 = vsel %vm1768, %v1604, -inf
        %v1785 = vsel %vm1769, %v1609, -inf
        %v1786 = vsel %vm1770, %v1612, -inf
        %v1787 = vsel %vm1771, %v1617, -inf
        %v1788 = vsel %vm1772, %v1620, -inf
        %v1789 = vsel %vm1773, %v1625, -inf
        %v1790 = vsel %vm1774, %v1628, -inf
        %v1791 = vsel %vm1775, %v1633, -inf
        %v1792 = vsel %vm1776, %v1636, -inf
        %v1793 = vsel %vm1777, %v1641, -inf
        %v1794 = vsel %vm1778, %v1644, -inf
        %v1795 = vsel %vm1763, %v1682, -inf
        %v1796 = vsel %vm1764, %v1685, -inf
        %v1797 = vsel %vm1765, %v1690, -inf
        %v1798 = vsel %vm1766, %v1693, -inf
        %v1799 = vsel %vm1767, %v1698, -inf
        %v1800 = vsel %vm1768, %v1701, -inf
        %v1801 = vsel %vm1769, %v1706, -inf
        %v1802 = vsel %vm1770, %v1709, -inf
        %v1803 = vsel %vm1771, %v1714, -inf
        %v1804 = vsel %vm1772, %v1717, -inf
        %v1805 = vsel %vm1773, %v1722, -inf
        %v1806 = vsel %vm1774, %v1725, -inf
        %v1807 = vsel %vm1775, %v1730, -inf
        %v1808 = vsel %vm1776, %v1733, -inf
        %v1809 = vsel %vm1777, %v1738, -inf
        %v1810 = vsel %vm1778, %v1741, -inf
        %1811 = vmax.xlane.f32.xlu0 %v1779
        %v1812 = vpop.xlane.xlu0 %1811
        %1813 = vmax.xlane.f32.xlu0 %v1780
        %v1814 = vpop.xlane.xlu0 %1813
        %1815 = vmax.xlane.f32.xlu0 %v1781
        %v1816 = vpop.xlane.xlu0 %1815
        %1817 = vmax.xlane.f32.xlu0 %v1782
        %v1818 = vpop.xlane.xlu0 %1817
        %1819 = vmax.xlane.f32.xlu0 %v1783
        %v1820 = vpop.xlane.xlu0 %1819
        %1821 = vmax.xlane.f32.xlu0 %v1784
        %v1822 = vpop.xlane.xlu0 %1821
        %1823 = vmax.xlane.f32.xlu0 %v1785
        %v1824 = vpop.xlane.xlu0 %1823
        %1825 = vmax.xlane.f32.xlu0 %v1786
        %v1826 = vpop.xlane.xlu0 %1825
        %1827 = vmax.xlane.f32.xlu0 %v1787
        %v1828 = vpop.xlane.xlu0 %1827
        %1829 = vmax.xlane.f32.xlu0 %v1788
        %v1830 = vpop.xlane.xlu0 %1829
        %1831 = vmax.xlane.f32.xlu0 %v1789
        %v1832 = vpop.xlane.xlu0 %1831
        %1833 = vmax.xlane.f32.xlu0 %v1790
        %v1834 = vpop.xlane.xlu0 %1833
        %1835 = vmax.xlane.f32.xlu0 %v1791
        %v1836 = vpop.xlane.xlu0 %1835
        %1837 = vmax.xlane.f32.xlu0 %v1792
        %v1838 = vpop.xlane.xlu0 %1837
        %1839 = vmax.xlane.f32.xlu0 %v1793
        %v1840 = vpop.xlane.xlu0 %1839
        %1841 = vmax.xlane.f32.xlu0 %v1794
        %v1842 = vpop.xlane.xlu0 %1841
        %1843 = vmax.xlane.f32.xlu0 %v1795
        %v1844 = vpop.xlane.xlu0 %1843
        %1845 = vmax.xlane.f32.xlu0 %v1796
        %v1846 = vpop.xlane.xlu0 %1845
        %1847 = vmax.xlane.f32.xlu0 %v1797
        %v1848 = vpop.xlane.xlu0 %1847
        %1849 = vmax.xlane.f32.xlu0 %v1798
        %v1850 = vpop.xlane.xlu0 %1849
        %1851 = vmax.xlane.f32.xlu0 %v1799
        %v1852 = vpop.xlane.xlu0 %1851
        %1853 = vmax.xlane.f32.xlu0 %v1800
        %v1854 = vpop.xlane.xlu0 %1853
        %1855 = vmax.xlane.f32.xlu0 %v1801
        %v1856 = vpop.xlane.xlu0 %1855
        %1857 = vmax.xlane.f32.xlu0 %v1802
        %v1858 = vpop.xlane.xlu0 %1857
        %1859 = vmax.xlane.f32.xlu0 %v1803
        %v1860 = vpop.xlane.xlu0 %1859
        %1861 = vmax.xlane.f32.xlu0 %v1804
        %v1862 = vpop.xlane.xlu0 %1861
        %1863 = vmax.xlane.f32.xlu0 %v1805
        %v1864 = vpop.xlane.xlu0 %1863
        %1865 = vmax.xlane.f32.xlu0 %v1806
        %v1866 = vpop.xlane.xlu0 %1865
        %1867 = vmax.xlane.f32.xlu0 %v1807
        %v1868 = vpop.xlane.xlu0 %1867
        %1869 = vmax.xlane.f32.xlu0 %v1808
        %v1870 = vpop.xlane.xlu0 %1869
        %1871 = vmax.xlane.f32.xlu0 %v1809
        %v1872 = vpop.xlane.xlu0 %1871
        %1873 = vmax.xlane.f32.xlu0 %v1810
        %v1874 = vpop.xlane.xlu0 %1873
        %v1875 = vsub.f32 %v1779, %v1812
        %v1876 = vsub.f32 %v1780, %v1814
        %v1877 = vsub.f32 %v1781, %v1816
        %v1878 = vsub.f32 %v1782, %v1818
        %v1879 = vsub.f32 %v1783, %v1820
        %v1880 = vsub.f32 %v1784, %v1822
        %v1881 = vsub.f32 %v1785, %v1824
        %v1882 = vsub.f32 %v1786, %v1826
        %v1883 = vsub.f32 %v1787, %v1828
        %v1884 = vsub.f32 %v1788, %v1830
        %v1885 = vsub.f32 %v1789, %v1832
        %v1886 = vsub.f32 %v1790, %v1834
        %v1887 = vsub.f32 %v1791, %v1836
        %v1888 = vsub.f32 %v1792, %v1838
        %v1889 = vsub.f32 %v1793, %v1840
        %v1890 = vsub.f32 %v1794, %v1842
        %v1891 = vsub.f32 %v1795, %v1844
        %v1892 = vsub.f32 %v1796, %v1846
        %v1893 = vsub.f32 %v1797, %v1848
        %v1894 = vsub.f32 %v1798, %v1850
        %v1895 = vsub.f32 %v1799, %v1852
        %v1896 = vsub.f32 %v1800, %v1854
        %v1897 = vsub.f32 %v1801, %v1856
        %v1898 = vsub.f32 %v1802, %v1858
        %v1899 = vsub.f32 %v1803, %v1860
        %v1900 = vsub.f32 %v1804, %v1862
        %v1901 = vsub.f32 %v1805, %v1864
        %v1902 = vsub.f32 %v1806, %v1866
        %v1903 = vsub.f32 %v1807, %v1868
        %v1904 = vsub.f32 %v1808, %v1870
        %v1905 = vsub.f32 %v1809, %v1872
        %v1906 = vsub.f32 %v1810, %v1874
        %v1907 = vmul.f32 %v1875, 1.442695
        %v1908 = vpow.pop %v1907
        %v1909 = vmul.f32 %v1876, 1.442695
        %v1910 = vpow.pop %v1909
        %v1911 = vmul.f32 %v1877, 1.442695
        %v1912 = vpow.pop %v1911
        %v1913 = vmul.f32 %v1878, 1.442695
        %v1914 = vpow.pop %v1913
        %v1915 = vmul.f32 %v1879, 1.442695
        %v1916 = vpow.pop %v1915
        %v1917 = vmul.f32 %v1880, 1.442695
        %v1918 = vpow.pop %v1917
        %v1919 = vmul.f32 %v1881, 1.442695
        %v1920 = vpow.pop %v1919
        %v1921 = vmul.f32 %v1882, 1.442695
        %v1922 = vpow.pop %v1921
        %v1923 = vmul.f32 %v1883, 1.442695
        %v1924 = vpow.pop %v1923
        %v1925 = vmul.f32 %v1884, 1.442695
        %v1926 = vpow.pop %v1925
        %v1927 = vmul.f32 %v1885, 1.442695
        %v1928 = vpow.pop %v1927
        %v1929 = vmul.f32 %v1886, 1.442695
        %v1930 = vpow.pop %v1929
        %v1931 = vmul.f32 %v1887, 1.442695
        %v1932 = vpow.pop %v1931
        %v1933 = vmul.f32 %v1888, 1.442695
        %v1934 = vpow.pop %v1933
        %v1935 = vmul.f32 %v1889, 1.442695
        %v1936 = vpow.pop %v1935
        %v1937 = vmul.f32 %v1890, 1.442695
        %v1938 = vpow.pop %v1937
        %v1939 = vmul.f32 %v1891, 1.442695
        %v1940 = vpow.pop %v1939
        %v1941 = vmul.f32 %v1892, 1.442695
        %v1942 = vpow.pop %v1941
        %v1943 = vmul.f32 %v1893, 1.442695
        %v1944 = vpow.pop %v1943
        %v1945 = vmul.f32 %v1894, 1.442695
        %v1946 = vpow.pop %v1945
        %v1947 = vmul.f32 %v1895, 1.442695
        %v1948 = vpow.pop %v1947
        %v1949 = vmul.f32 %v1896, 1.442695
        %v1950 = vpow.pop %v1949
        %v1951 = vmul.f32 %v1897, 1.442695
        %v1952 = vpow.pop %v1951
        %v1953 = vmul.f32 %v1898, 1.442695
        %v1954 = vpow.pop %v1953
        %v1955 = vmul.f32 %v1899, 1.442695
        %v1956 = vpow.pop %v1955
        %v1957 = vmul.f32 %v1900, 1.442695
        %v1958 = vpow.pop %v1957
        %v1959 = vmul.f32 %v1901, 1.442695
        %v1960 = vpow.pop %v1959
        %v1961 = vmul.f32 %v1902, 1.442695
        %v1962 = vpow.pop %v1961
        %v1963 = vmul.f32 %v1903, 1.442695
        %v1964 = vpow.pop %v1963
        %v1965 = vmul.f32 %v1904, 1.442695
        %v1966 = vpow.pop %v1965
        %v1967 = vmul.f32 %v1905, 1.442695
        %v1968 = vpow.pop %v1967
        %v1969 = vmul.f32 %v1906, 1.442695
        %v1970 = vpow.pop %v1969
        %1971 = vadd.xlane.f32.xlu0 %v1908
        %v1972 = vpop.xlane.xlu0 %1971
        %1973 = vadd.xlane.f32.xlu0 %v1910
        %v1974 = vpop.xlane.xlu0 %1973
        %1975 = vadd.xlane.f32.xlu0 %v1912
        %v1976 = vpop.xlane.xlu0 %1975
        %1977 = vadd.xlane.f32.xlu0 %v1914
        %v1978 = vpop.xlane.xlu0 %1977
        %1979 = vadd.xlane.f32.xlu0 %v1916
        %v1980 = vpop.xlane.xlu0 %1979
        %1981 = vadd.xlane.f32.xlu0 %v1918
        %v1982 = vpop.xlane.xlu0 %1981
        %1983 = vadd.xlane.f32.xlu0 %v1920
        %v1984 = vpop.xlane.xlu0 %1983
        %1985 = vadd.xlane.f32.xlu0 %v1922
        %v1986 = vpop.xlane.xlu0 %1985
        %1987 = vadd.xlane.f32.xlu0 %v1924
        %v1988 = vpop.xlane.xlu0 %1987
        %1989 = vadd.xlane.f32.xlu0 %v1926
        %v1990 = vpop.xlane.xlu0 %1989
        %1991 = vadd.xlane.f32.xlu0 %v1928
        %v1992 = vpop.xlane.xlu0 %1991
        %1993 = vadd.xlane.f32.xlu0 %v1930
        %v1994 = vpop.xlane.xlu0 %1993
        %1995 = vadd.xlane.f32.xlu0 %v1932
        %v1996 = vpop.xlane.xlu0 %1995
        %1997 = vadd.xlane.f32.xlu0 %v1934
        %v1998 = vpop.xlane.xlu0 %1997
        %1999 = vadd.xlane.f32.xlu0 %v1936
        %v2000 = vpop.xlane.xlu0 %1999
        %2001 = vadd.xlane.f32.xlu0 %v1938
        %v2002 = vpop.xlane.xlu0 %2001
        %2003 = vadd.xlane.f32.xlu0 %v1940
        %v2004 = vpop.xlane.xlu0 %2003
        %2005 = vadd.xlane.f32.xlu0 %v1942
        %v2006 = vpop.xlane.xlu0 %2005
        %2007 = vadd.xlane.f32.xlu0 %v1944
        %v2008 = vpop.xlane.xlu0 %2007
        %2009 = vadd.xlane.f32.xlu0 %v1946
        %v2010 = vpop.xlane.xlu0 %2009
        %2011 = vadd.xlane.f32.xlu0 %v1948
        %v2012 = vpop.xlane.xlu0 %2011
        %2013 = vadd.xlane.f32.xlu0 %v1950
        %v2014 = vpop.xlane.xlu0 %2013
        %2015 = vadd.xlane.f32.xlu0 %v1952
        %v2016 = vpop.xlane.xlu0 %2015
        %2017 = vadd.xlane.f32.xlu0 %v1954
        %v2018 = vpop.xlane.xlu0 %2017
        %2019 = vadd.xlane.f32.xlu0 %v1956
        %v2020 = vpop.xlane.xlu0 %2019
        %2021 = vadd.xlane.f32.xlu0 %v1958
        %v2022 = vpop.xlane.xlu0 %2021
        %2023 = vadd.xlane.f32.xlu0 %v1960
        %v2024 = vpop.xlane.xlu0 %2023
        %2025 = vadd.xlane.f32.xlu0 %v1962
        %v2026 = vpop.xlane.xlu0 %2025
        %2027 = vadd.xlane.f32.xlu0 %v1964
        %v2028 = vpop.xlane.xlu0 %2027
        %2029 = vadd.xlane.f32.xlu0 %v1966
        %v2030 = vpop.xlane.xlu0 %2029
        %2031 = vadd.xlane.f32.xlu0 %v1968
        %v2032 = vpop.xlane.xlu0 %2031
        %2033 = vadd.xlane.f32.xlu0 %v1970
        %v2034 = vpop.xlane.xlu0 %2033
        %v2035 = vpack.c.bf16 %v1910, %v1908
        %v2036 = vpack.c.bf16 %v1914, %v1912
        %v2037 = vpack.c.bf16 %v1918, %v1916
        %v2038 = vpack.c.bf16 %v1922, %v1920
        %v2039 = vpack.c.bf16 %v1926, %v1924
        %v2040 = vpack.c.bf16 %v1930, %v1928
        %v2041 = vpack.c.bf16 %v1934, %v1932
        %v2042 = vpack.c.bf16 %v1938, %v1936
        %v2043 = vpack.c.bf16 %v1942, %v1940
        %v2044 = vpack.c.bf16 %v1946, %v1944
        %v2045 = vpack.c.bf16 %v1950, %v1948
        %v2046 = vpack.c.bf16 %v1954, %v1952
        %v2047 = vpack.c.bf16 %v1958, %v1956
        %v2048 = vpack.c.bf16 %v1962, %v1960
        %v2049 = vpack.c.bf16 %v1966, %v1964
        %v2050 = vpack.c.bf16 %v1970, %v1968
        %2051 = vmatprep.subr.bf16.mxu0 0
        %2052 = vmatpush1.bf16.msra.mxu0 %v1534
        %2053 = vmatprep.subr.bf16.mxu0 0
        %2054 = vmatpush1.bf16.msra.mxu0 %v1535
        %2055 = vmatprep.subr.bf16.mxu0 0
        %2056 = vmatpush1.bf16.msra.mxu0 %v1536
        %2057 = vmatprep.subr.bf16.mxu0 0
        %2058 = vmatpush1.bf16.msra.mxu0 %v1537
        %2059 = vmatprep.subr.bf16.mxu0 0
        %2060 = vmatpush1.bf16.msra.mxu0 %v1538
        %2061 = vmatprep.subr.bf16.mxu0 0
        %2062 = vmatpush1.bf16.msra.mxu0 %v1539
        %2063 = vmatprep.subr.bf16.mxu0 0
        %2064 = vmatpush1.bf16.msra.mxu0 %v1540
        %2065 = vmatprep.subr.bf16.mxu0 0
        %2066 = vmatpush1.bf16.msra.mxu0 %v1541
        %2067 = vmatprep.subr.bf16.mxu0 0
        %2068 = vmatpush1.bf16.msra.mxu0 0
        %2069 = vmatprep.subr.bf16.mxu0 0
        %2070 = vmatpush1.bf16.msra.mxu0 0
        %2071 = vmatprep.subr.bf16.mxu0 0
        %2072 = vmatpush1.bf16.msra.mxu0 0
        %2073 = vmatprep.subr.bf16.mxu0 0
        %2074 = vmatpush1.bf16.msra.mxu0 0
        %2075 = vmatprep.subr.bf16.mxu0 0
        %2076 = vmatpush1.bf16.msra.mxu0 0
        %2077 = vmatprep.subr.bf16.mxu0 0
        %2078 = vmatpush1.bf16.msra.mxu0 0
        %2079 = vmatprep.subr.bf16.mxu0 0
        %2080 = vmatpush1.bf16.msra.mxu0 0
        %2081 = vmatprep.subr.bf16.mxu0 0
        %2082 = vmatpush1.bf16.msra.mxu0 0
        %2083 = vmatprep.mubr.bf16.mxu0 0
        %2084 = vmatmul.mubr.bf16.gmra.mrb[0].mxu0 %v2035
        %v2085 = vpop.f32.mrb[0].mxu0
        %v2086 = vadd.f32 0.0, %v2085
        %v2087 = vpop.f32.mrb[0].mxu0
        %v2088 = vpop.f32.mrb[0].mxu0
        %v2089 = vadd.f32 0.0, %v2088
        %v2090 = vpop.f32.mrb[0].mxu0
        %2091 = vmatprep.mubr.bf16.mxu0 0
        %2092 = vmatmul.mubr.bf16.gmra.mrb[0].mxu0 %v2036
        %v2093 = vpop.f32.mrb[0].mxu0
        %v2094 = vadd.f32 0.0, %v2093
        %v2095 = vpop.f32.mrb[0].mxu0
        %v2096 = vpop.f32.mrb[0].mxu0
        %v2097 = vadd.f32 0.0, %v2096
        %v2098 = vpop.f32.mrb[0].mxu0
        %2099 = vmatprep.mubr.bf16.mxu0 0
        %2100 = vmatmul.mubr.bf16.gmra.mrb[0].mxu0 %v2037
        %v2101 = vpop.f32.mrb[0].mxu0
        %v2102 = vadd.f32 0.0, %v2101
        %v2103 = vpop.f32.mrb[0].mxu0
        %v2104 = vpop.f32.mrb[0].mxu0
        %v2105 = vadd.f32 0.0, %v2104
        %v2106 = vpop.f32.mrb[0].mxu0
        %2107 = vmatprep.mubr.bf16.mxu0 0
        %2108 = vmatmul.mubr.bf16.gmra.mrb[0].mxu0 %v2038
        %v2109 = vpop.f32.mrb[0].mxu0
        %v2110 = vadd.f32 0.0, %v2109
        %v2111 = vpop.f32.mrb[0].mxu0
        %v2112 = vpop.f32.mrb[0].mxu0
        %v2113 = vadd.f32 0.0, %v2112
        %v2114 = vpop.f32.mrb[0].mxu0
        %2115 = vmatprep.mubr.bf16.mxu0 0
        %2116 = vmatmul.mubr.bf16.gmra.mrb[0].mxu0 %v2039
        %v2117 = vpop.f32.mrb[0].mxu0
        %v2118 = vadd.f32 0.0, %v2117
        %v2119 = vpop.f32.mrb[0].mxu0
        %v2120 = vpop.f32.mrb[0].mxu0
        %v2121 = vadd.f32 0.0, %v2120
        %v2122 = vpop.f32.mrb[0].mxu0
        %2123 = vmatprep.mubr.bf16.mxu0 0
        %2124 = vmatmul.mubr.bf16.gmra.mrb[0].mxu0 %v2040
        %v2125 = vpop.f32.mrb[0].mxu0
        %v2126 = vadd.f32 0.0, %v2125
        %v2127 = vpop.f32.mrb[0].mxu0
        %v2128 = vpop.f32.mrb[0].mxu0
        %v2129 = vadd.f32 0.0, %v2128
        %v2130 = vpop.f32.mrb[0].mxu0
        %2131 = vmatprep.mubr.bf16.mxu0 0
        %2132 = vmatmul.mubr.bf16.gmra.mrb[0].mxu0 %v2041
        %v2133 = vpop.f32.mrb[0].mxu0
        %v2134 = vadd.f32 0.0, %v2133
        %v2135 = vpop.f32.mrb[0].mxu0
        %v2136 = vpop.f32.mrb[0].mxu0
        %v2137 = vadd.f32 0.0, %v2136
        %v2138 = vpop.f32.mrb[0].mxu0
        %2139 = vmatprep.mubr.bf16.mxu0 0
        %2140 = vmatmul.mubr.bf16.gmra.mrb[0].mxu0 %v2042
        %v2141 = vpop.f32.mrb[0].mxu0
        %v2142 = vadd.f32 0.0, %v2141
        %v2143 = vpop.f32.mrb[0].mxu0
        %v2144 = vpop.f32.mrb[0].mxu0
        %v2145 = vadd.f32 0.0, %v2144
        %v2146 = vpop.f32.mrb[0].mxu0
        %2147 = vdwg.mxu0
        %2148 = vmatprep.subr.bf16.mxu0 0
        %2149 = vmatpush1.bf16.msra.mxu0 %v1542
        %2150 = vmatprep.subr.bf16.mxu0 0
        %2151 = vmatpush1.bf16.msra.mxu0 %v1543
        %2152 = vmatprep.subr.bf16.mxu0 0
        %2153 = vmatpush1.bf16.msra.mxu0 %v1544
        %2154 = vmatprep.subr.bf16.mxu0 0
        %2155 = vmatpush1.bf16.msra.mxu0 %v1545
        %2156 = vmatprep.subr.bf16.mxu0 0
        %2157 = vmatpush1.bf16.msra.mxu0 %v1546
        %2158 = vmatprep.subr.bf16.mxu0 0
        %2159 = vmatpush1.bf16.msra.mxu0 %v1547
        %2160 = vmatprep.subr.bf16.mxu0 0
        %2161 = vmatpush1.bf16.msra.mxu0 %v1548
        %2162 = vmatprep.subr.bf16.mxu0 0
        %2163 = vmatpush1.bf16.msra.mxu0 %v1549
        %2164 = vmatprep.subr.bf16.mxu0 0
        %2165 = vmatpush1.bf16.msra.mxu0 0
        %2166 = vmatprep.subr.bf16.mxu0 0
        %2167 = vmatpush1.bf16.msra.mxu0 0
        %2168 = vmatprep.subr.bf16.mxu0 0
        %2169 = vmatpush1.bf16.msra.mxu0 0
        %2170 = vmatprep.subr.bf16.mxu0 0
        %2171 = vmatpush1.bf16.msra.mxu0 0
        %2172 = vmatprep.subr.bf16.mxu0 0
        %2173 = vmatpush1.bf16.msra.mxu0 0
        %2174 = vmatprep.subr.bf16.mxu0 0
        %2175 = vmatpush1.bf16.msra.mxu0 0
        %2176 = vmatprep.subr.bf16.mxu0 0
        %2177 = vmatpush1.bf16.msra.mxu0 0
        %2178 = vmatprep.subr.bf16.mxu0 0
        %2179 = vmatpush1.bf16.msra.mxu0 0
        %2180 = vmatprep.mubr.bf16.mxu0 0
        %2181 = vmatmul.mubr.bf16.gmra.mrb[0].mxu0 %v2043
        %v2182 = vpop.f32.mrb[0].mxu0
        %v2183 = vadd.f32 0.0, %v2182
        %v2184 = vpop.f32.mrb[0].mxu0
        %v2185 = vpop.f32.mrb[0].mxu0
        %v2186 = vadd.f32 0.0, %v2185
        %v2187 = vpop.f32.mrb[0].mxu0
        %2188 = vmatprep.mubr.bf16.mxu0 0
        %2189 = vmatmul.mubr.bf16.gmra.mrb[0].mxu0 %v2044
        %v2190 = vpop.f32.mrb[0].mxu0
        %v2191 = vadd.f32 0.0, %v2190
        %v2192 = vpop.f32.mrb[0].mxu0
        %v2193 = vpop.f32.mrb[0].mxu0
        %v2194 = vadd.f32 0.0, %v2193
        %v2195 = vpop.f32.mrb[0].mxu0
        %2196 = vmatprep.mubr.bf16.mxu0 0
        %2197 = vmatmul.mubr.bf16.gmra.mrb[0].mxu0 %v2045
        %v2198 = vpop.f32.mrb[0].mxu0
        %v2199 = vadd.f32 0.0, %v2198
        %v2200 = vpop.f32.mrb[0].mxu0
        %v2201 = vpop.f32.mrb[0].mxu0
        %v2202 = vadd.f32 0.0, %v2201
        %v2203 = vpop.f32.mrb[0].mxu0
        %2204 = vmatprep.mubr.bf16.mxu0 0
        %2205 = vmatmul.mubr.bf16.gmra.mrb[0].mxu0 %v2046
        %v2206 = vpop.f32.mrb[0].mxu0
        %v2207 = vadd.f32 0.0, %v2206
        %v2208 = vpop.f32.mrb[0].mxu0
        %v2209 = vpop.f32.mrb[0].mxu0
        %v2210 = vadd.f32 0.0, %v2209
        %v2211 = vpop.f32.mrb[0].mxu0
        %2212 = vmatprep.mubr.bf16.mxu0 0
        %2213 = vmatmul.mubr.bf16.gmra.mrb[0].mxu0 %v2047
        %v2214 = vpop.f32.mrb[0].mxu0
        %v2215 = vadd.f32 0.0, %v2214
        %v2216 = vpop.f32.mrb[0].mxu0
        %v2217 = vpop.f32.mrb[0].mxu0
        %v2218 = vadd.f32 0.0, %v2217
        %v2219 = vpop.f32.mrb[0].mxu0
        %2220 = vmatprep.mubr.bf16.mxu0 0
        %2221 = vmatmul.mubr.bf16.gmra.mrb[0].mxu0 %v2048
        %v2222 = vpop.f32.mrb[0].mxu0
        %v2223 = vadd.f32 0.0, %v2222
        %v2224 = vpop.f32.mrb[0].mxu0
        %v2225 = vpop.f32.mrb[0].mxu0
        %v2226 = vadd.f32 0.0, %v2225
        %v2227 = vpop.f32.mrb[0].mxu0
        %2228 = vmatprep.mubr.bf16.mxu0 0
        %2229 = vmatmul.mubr.bf16.gmra.mrb[0].mxu0 %v2049
        %v2230 = vpop.f32.mrb[0].mxu0
        %v2231 = vadd.f32 0.0, %v2230
        %v2232 = vpop.f32.mrb[0].mxu0
        %v2233 = vpop.f32.mrb[0].mxu0
        %v2234 = vadd.f32 0.0, %v2233
        %v2235 = vpop.f32.mrb[0].mxu0
        %2236 = vmatprep.mubr.bf16.mxu0 0
        %2237 = vmatmul.mubr.bf16.gmra.mrb[0].mxu0 %v2050
        %v2238 = vpop.f32.mrb[0].mxu0
        %v2239 = vadd.f32 0.0, %v2238
        %v2240 = vpop.f32.mrb[0].mxu0
        %v2241 = vpop.f32.mrb[0].mxu0
        %v2242 = vadd.f32 0.0, %v2241
        %v2243 = vpop.f32.mrb[0].mxu0
        %2244 = vdwg.mxu0
        %v2245 = vrcp.pop %v1972
        %v2246 = vrcp.pop %v1974
        %v2247 = vrcp.pop %v1976
        %v2248 = vrcp.pop %v1978
        %v2249 = vrcp.pop %v1980
        %v2250 = vrcp.pop %v1982
        %v2251 = vrcp.pop %v1984
        %v2252 = vrcp.pop %v1986
        %v2253 = vrcp.pop %v1988
        %v2254 = vrcp.pop %v1990
        %v2255 = vrcp.pop %v1992
        %v2256 = vrcp.pop %v1994
        %v2257 = vrcp.pop %v1996
        %v2258 = vrcp.pop %v1998
        %v2259 = vrcp.pop %v2000
        %v2260 = vrcp.pop %v2002
        %v2261 = vrcp.pop %v2004
        %v2262 = vrcp.pop %v2006
        %v2263 = vrcp.pop %v2008
        %v2264 = vrcp.pop %v2010
        %v2265 = vrcp.pop %v2012
        %v2266 = vrcp.pop %v2014
        %v2267 = vrcp.pop %v2016
        %v2268 = vrcp.pop %v2018
        %v2269 = vrcp.pop %v2020
        %v2270 = vrcp.pop %v2022
        %v2271 = vrcp.pop %v2024
        %v2272 = vrcp.pop %v2026
        %v2273 = vrcp.pop %v2028
        %v2274 = vrcp.pop %v2030
        %v2275 = vrcp.pop %v2032
        %v2276 = vrcp.pop %v2034
        %v2277 = vmul.f32 %v2086, %v2245
        %v2278 = vmul.f32 %v2089, %v2246
        %v2279 = vmul.f32 %v2094, %v2247
        %v2280 = vmul.f32 %v2097, %v2248
        %v2281 = vmul.f32 %v2102, %v2249
        %v2282 = vmul.f32 %v2105, %v2250
        %v2283 = vmul.f32 %v2110, %v2251
        %v2284 = vmul.f32 %v2113, %v2252
        %v2285 = vmul.f32 %v2118, %v2253
        %v2286 = vmul.f32 %v2121, %v2254
        %v2287 = vmul.f32 %v2126, %v2255
        %v2288 = vmul.f32 %v2129, %v2256
        %v2289 = vmul.f32 %v2134, %v2257
        %v2290 = vmul.f32 %v2137, %v2258
        %v2291 = vmul.f32 %v2142, %v2259
        %v2292 = vmul.f32 %v2145, %v2260
        %v2293 = vmul.f32 %v2183, %v2261
        %v2294 = vmul.f32 %v2186, %v2262
        %v2295 = vmul.f32 %v2191, %v2263
        %v2296 = vmul.f32 %v2194, %v2264
        %v2297 = vmul.f32 %v2199, %v2265
        %v2298 = vmul.f32 %v2202, %v2266
        %v2299 = vmul.f32 %v2207, %v2267
        %v2300 = vmul.f32 %v2210, %v2268
        %v2301 = vmul.f32 %v2215, %v2269
        %v2302 = vmul.f32 %v2218, %v2270
        %v2303 = vmul.f32 %v2223, %v2271
        %v2304 = vmul.f32 %v2226, %v2272
        %v2305 = vmul.f32 %v2231, %v2273
        %v2306 = vmul.f32 %v2234, %v2274
        %v2307 = vmul.f32 %v2239, %v2275
        %v2308 = vmul.f32 %v2242, %v2276
        %vm2309 = vcmask 523264
        %2310 = vst.msk [vmem:[%s167] sm:$0xff] %vm2309, %v2277
        %2311 = vst.msk [vmem:[%s167 + $0x8] sm:$0xff] %vm2309, %v2278
        %2312 = vst.msk [vmem:[%s167 + $0x10] sm:$0xff] %vm2309, %v2279
        %2313 = vst.msk [vmem:[%s167 + $0x18] sm:$0xff] %vm2309, %v2280
        %2314 = vst.msk [vmem:[%s167 + $0x20] sm:$0xff] %vm2309, %v2281
        %2315 = vst.msk [vmem:[%s167 + $0x28] sm:$0xff] %vm2309, %v2282
        %2316 = vst.msk [vmem:[%s167 + $0x30] sm:$0xff] %vm2309, %v2283
        %2317 = vst.msk [vmem:[%s167 + $0x38] sm:$0xff] %vm2309, %v2284
        %2318 = vst.msk [vmem:[%s167 + $0x40] sm:$0xff] %vm2309, %v2285
        %2319 = vst.msk [vmem:[%s167 + $0x48] sm:$0xff] %vm2309, %v2286
        %2320 = vst.msk [vmem:[%s167 + $0x50] sm:$0xff] %vm2309, %v2287
        %2321 = vst.msk [vmem:[%s167 + $0x58] sm:$0xff] %vm2309, %v2288
        %2322 = vst.msk [vmem:[%s167 + $0x60] sm:$0xff] %vm2309, %v2289
        %2323 = vst.msk [vmem:[%s167 + $0x68] sm:$0xff] %vm2309, %v2290
        %2324 = vst.msk [vmem:[%s167 + $0x70] sm:$0xff] %vm2309, %v2291
        %2325 = vst.msk [vmem:[%s167 + $0x78] sm:$0xff] %vm2309, %v2292
        %2326 = vst.msk [vmem:[%s167 + $0x80] sm:$0xff] %vm2309, %v2293
        %2327 = vst.msk [vmem:[%s167 + $0x88] sm:$0xff] %vm2309, %v2294
        %2328 = vst.msk [vmem:[%s167 + $0x90] sm:$0xff] %vm2309, %v2295
        %2329 = vst.msk [vmem:[%s167 + $0x98] sm:$0xff] %vm2309, %v2296
        %2330 = vst.msk [vmem:[%s167 + $0xa0] sm:$0xff] %vm2309, %v2297
        %2331 = vst.msk [vmem:[%s167 + $0xa8] sm:$0xff] %vm2309, %v2298
        %2332 = vst.msk [vmem:[%s167 + $0xb0] sm:$0xff] %vm2309, %v2299
        %2333 = vst.msk [vmem:[%s167 + $0xb8] sm:$0xff] %vm2309, %v2300
        %2334 = vst.msk [vmem:[%s167 + $0xc0] sm:$0xff] %vm2309, %v2301
        %2335 = vst.msk [vmem:[%s167 + $0xc8] sm:$0xff] %vm2309, %v2302
        %2336 = vst.msk [vmem:[%s167 + $0xd0] sm:$0xff] %vm2309, %v2303
        %2337 = vst.msk [vmem:[%s167 + $0xd8] sm:$0xff] %vm2309, %v2304
        %2338 = vst.msk [vmem:[%s167 + $0xe0] sm:$0xff] %vm2309, %v2305
        %2339 = vst.msk [vmem:[%s167 + $0xe8] sm:$0xff] %vm2309, %v2306
        %2340 = vst.msk [vmem:[%s167 + $0xf0] sm:$0xff] %vm2309, %v2307
        %2341 = vst.msk [vmem:[%s167 + $0xf8] sm:$0xff] %vm2309, %v2308
        %s2342 = smul.u32 2, %s16
        %p2343 = scmp.lt.s32.totalorder %s2342, 7
        %s2344 = scalar_select %p2343, %s2342, 7
        %s2345 = smul.addr %s2344, 16
        %s2346 = smul.addr %s2345, 8
        %s2347 = scalar_lea.vmem %s2, %s2346
        // Predicated region
        $region33: #{head_forward.1} parent=27 // pred_check
          %p2348 = pneg %p81
        $region34: #{head_forward.1} parent=27 // pred_check_branch
          %2350 = sbr.rel (%p2348) target = $region36
        $region35: #{head_forward.1} parent=27 // pred_region
          %s2351 = smul.u32 2, %s16
        $region36: #{head_forward.1} parent=27 // pred_fallthru
          _
      $region28: #{head_forward.1} parent=5 // pred_fallthru
        _
      %p2352 = scmp.le.s32.totalorder 2, %s11
      // Predicated region
      $region37: #{head_forward.1} parent=5 // pred_check
        %p2353 = pneg %p2352
      $region38: #{head_forward.1} parent=5 // pred_check_branch
        %2355 = sbr.rel (%p2353) target = $region40
      $region39: #{head_forward.1} parent=5 // pred_region
        %s2356 = ssub.s32 %s11, 2
        // Predicated region
        $region41: #{head_forward.1} parent=39 // pred_check
          %p2357 = pneg %p87
        $region42: #{head_forward.1} parent=39 // pred_check_branch
          %2359 = sbr.rel (%p2357) target = $region44
        $region43: #{head_forward.1} parent=39 // pred_region
          %s2360 = smul.u32 2, %s17
          %p2361 = scmp.lt.s32.totalorder %s2360, 7
          %s2362 = scalar_select %p2361, %s2360, 7
          %s2363 = smul.addr %s2362, 16
          %s2364 = smul.addr %s2363, 8
          %s2365 = scalar_lea.vmem %s2, %s2364
        $region44: #{head_forward.1} parent=39 // pred_fallthru
          _
      $region40: #{head_forward.1} parent=5 // pred_fallthru
        _
    $region6: #{head_forward.1} parent=1 // loop_footer
      %s15 = sadd.s32 1, %s11
    $region7: #{head_forward.1} parent=1 // loop_footer_branch
      %10 = sbr.rel target = $region3
    $region8: #{head_forward.1} parent=1 // loop_exit
      _
    %2366 = vsyncpa [#allocation3], 1
    %s2367 = scalar_lea.sflag [#allocation3], 1
    %2368 = vsyncpa %s2367, 1

</llo_original>
